<compile_context>
chip_gen: v7x
topology: tpu7x:2x2x1
jax: 0.10.0
libtpu: 0.0.40
codegen_flags: <defaults>
</compile_context>

<pallas_src>
import numpy as np
import jax
import jax.numpy as jnp
from jax import lax
from jax.experimental import pallas as pl
from jax.experimental.pallas import tpu as pltpu


# ----------------------------------------------------------------------------
# Host-side helpers
# ----------------------------------------------------------------------------
def make_shift_matrices(H, W):
    """S[t] @ x_flat implements the zero-padded (dh, dw) shift for tap t of a 3x3 window."""
    P = H * W
    S = np.zeros((9, P, P), np.float32)
    t = 0
    for dh in (-1, 0, 1):
        for dw in (-1, 0, 1):
            for h in range(H):
                for w in range(W):
                    hh, ww = h + dh, w + dw
                    if 0 <= hh < H and 0 <= ww < W:
                        S[t, h * W + w, hh * W + ww] = 1.0
            t += 1
    return S


def init_fim_params(key, channels):
    """Deterministic FIMBlock parameters (BN already folded to eval-mode affine)."""
    ks = jax.random.split(key, 12)
    f32 = jnp.float32
    eps = 1e-5
    p = {
        'dw_w':    0.30 * jax.random.normal(ks[0], (channels, 3, 3), f32),   # depthwise (C,3,3)
        'pw_w_oi': 0.30 * jax.random.normal(ks[1], (channels, channels), f32),
        'c1_w_oi': 0.30 * jax.random.normal(ks[2], (channels, channels), f32),
        'c1_b':    0.10 * jax.random.normal(ks[3], (channels,), f32),
        'c2_w_oi': 0.30 * jax.random.normal(ks[4], (channels, channels), f32),
        'c2_b':    0.10 * jax.random.normal(ks[5], (channels,), f32),
    }
    for name, k0 in (('dw', 6), ('pw', 9)):
        gamma = 1.0 + 0.10 * jax.random.normal(ks[k0], (channels,), f32)
        beta = 0.10 * jax.random.normal(ks[k0 + 1], (channels,), f32)
        mean = 0.10 * jax.random.normal(ks[k0 + 2], (channels,), f32)
        var = 0.5 + jax.nn.sigmoid(jax.random.normal(jax.random.fold_in(ks[k0], 7),
                                                     (channels,), f32))
        scale = gamma * lax.rsqrt(var + eps)
        p[f'bn_{name}_scale'] = scale
        p[f'bn_{name}_bias'] = beta - mean * scale
    return p


# ----------------------------------------------------------------------------
# Pallas kernel: one batch image (P = H*W pixels, C channels) per grid step.
# ----------------------------------------------------------------------------
def fim_kernel(x_ref, shifts_ref, dwk_ref, bn_dw_s_ref, bn_dw_b_ref,
               pw_w_ref, bn_pw_s_ref, bn_pw_b_ref,
               c1_w_ref, c1_b_ref, c2_w_ref, c2_b_ref, out_ref):
    x = x_ref[...].astype(jnp.float32)                               # (P, C)

    # ---- DWConv: depthwise 3x3 (stride 1, pad 1) as 9 shift-matmul taps ----
    acc = jnp.zeros_like(x)
    for t in range(9):
        tap = jnp.dot(shifts_ref[t], x, preferred_element_type=jnp.float32)
        acc = acc + tap * dwk_ref[t]                                  # (P,C) * (1,C)
    h = jnp.clip(acc * bn_dw_s_ref[...] + bn_dw_b_ref[...], 0.0, 6.0)  # BN + ReLU6

    # ---- pointwise 1x1 conv + BN + ReLU6 ----
    h = jnp.dot(h, pw_w_ref[...], preferred_element_type=jnp.float32)
    h = jnp.clip(h * bn_pw_s_ref[...] + bn_pw_b_ref[...], 0.0, 6.0)

    # ---- residual ----
    y = x + h

    # ---- conv1 (1x1 + bias) ----
    y = jnp.dot(y, c1_w_ref[...], preferred_element_type=jnp.float32) + c1_b_ref[...]

    # ---- gate: sigmoid(AvgPool2d(2)); for 2x2 spatial this is the global mean ----
    pooled = jnp.mean(y, axis=0, keepdims=True)                       # (1, C)
    gate = 1.0 / (1.0 + jnp.exp(-pooled))
    y = y * gate

    # ---- conv2 (1x1 + bias) ----
    y = jnp.dot(y, c2_w_ref[...], preferred_element_type=jnp.float32) + c2_b_ref[...]

    out_ref[...] = y.astype(out_ref.dtype)


def fim_block_pallas(x, params):
    B, C, H, W = x.shape
    # nn.AvgPool2d(2) gate only broadcasts against the full-res tensor when the
    # pooled spatial dims are 1 (the only shapes for which the PyTorch forward runs).
    assert H == 2 and W == 2, "FIMBlock forward requires 2x2 spatial input"
    P = H * W
    dtype = x.dtype

    # Channel-in-lane layout: (B, C, H, W) -> (B, H*W, C)
    x2d = jnp.transpose(x, (0, 2, 3, 1)).reshape(B, P, C)

    shifts = jnp.asarray(make_shift_matrices(H, W))                    # (9, P, P)
    dwk9 = jnp.transpose(params['dw_w'], (1, 2, 0)).reshape(9, 1, C)   # (9, 1, C)

    def row(v):                                                        # (C,) -> (1, C)
        return v.reshape(1, C).astype(jnp.float32)

    pw_w = jnp.transpose(params['pw_w_oi']).astype(jnp.float32)        # (Cin, Cout)
    c1_w = jnp.transpose(params['c1_w_oi']).astype(jnp.float32)
    c2_w = jnp.transpose(params['c2_w_oi']).astype(jnp.float32)

    full3 = lambda shape: pl.BlockSpec(shape, lambda b: (0, 0, 0))
    full2 = lambda shape: pl.BlockSpec(shape, lambda b: (0, 0))
    slab = pl.BlockSpec((None, P, C), lambda b: (b, 0, 0))             # squeezed batch dim

    flops = B * (9 * 2 * P * P * C + 9 * 2 * P * C + 3 * 2 * P * C * C + 12 * P * C)
    bytes_accessed = 4 * (2 * B * P * C + 9 * P * P + 9 * C + 3 * C * C + 8 * C)

    out2d = pl.pallas_call(
        fim_kernel,
        out_shape=jax.ShapeDtypeStruct((B, P, C), dtype),
        grid_spec=pltpu.PrefetchScalarGridSpec(
            num_scalar_prefetch=0,
            grid=(B,),
            in_specs=[
                slab,                              # x
                full3((9, P, P)),                  # shift matrices
                full3((9, 1, C)),                  # depthwise tap weights
                full2((1, C)), full2((1, C)),      # bn_dw scale / bias
                full2((C, C)),                     # pointwise weight (Cin, Cout)
                full2((1, C)), full2((1, C)),      # bn_pw scale / bias
                full2((C, C)), full2((1, C)),      # conv1 w / b
                full2((C, C)), full2((1, C)),      # conv2 w / b
            ],
            out_specs=slab,
        ),
        compiler_params=pltpu.CompilerParams(
            dimension_semantics=("parallel",)),
        cost_estimate=pl.CostEstimate(
            flops=flops, transcendentals=B * C, bytes_accessed=bytes_accessed),
    )(x2d, shifts, dwk9,
      row(params['bn_dw_scale']), row(params['bn_dw_bias']),
      pw_w,
      row(params['bn_pw_scale']), row(params['bn_pw_bias']),
      c1_w, row(params['c1_b']),
      c2_w, row(params['c2_b']))

    return jnp.transpose(out2d.reshape(B, H, W, C), (0, 3, 1, 2))


# ----------------------------------------------------------------------------
# Pure-JAX reference (mirrors the PyTorch FIMBlock forward, eval-mode BN).
# ----------------------------------------------------------------------------
def fim_block_ref(x, p):
    B, C, H, W = x.shape
    w_dw = p['dw_w'].reshape(C, 1, 3, 3)
    h = lax.conv_general_dilated(
        x, w_dw, window_strides=(1, 1), padding=((1, 1), (1, 1)),
        dimension_numbers=('NCHW', 'OIHW', 'NCHW'), feature_group_count=C)
    h = h * p['bn_dw_scale'][None, :, None, None] + p['bn_dw_bias'][None, :, None, None]
    h = jnp.clip(h, 0.0, 6.0)
    h = jnp.einsum('oi,bihw->bohw', p['pw_w_oi'], h)
    h = h * p['bn_pw_scale'][None, :, None, None] + p['bn_pw_bias'][None, :, None, None]
    h = jnp.clip(h, 0.0, 6.0)
    y = x + h
    y = jnp.einsum('oi,bihw->bohw', p['c1_w_oi'], y) + p['c1_b'][None, :, None, None]
    pooled = lax.reduce_window(y, 0.0, lax.add, (1, 1, 2, 2), (1, 1, 2, 2), 'VALID') / 4.0
    y = y * jax.nn.sigmoid(pooled)
    y = jnp.einsum('oi,bihw->bohw', p['c2_w_oi'], y) + p['c2_b'][None, :, None, None]
    return y


if __name__ == "__main__":
    key = jax.random.PRNGKey(0)
    kx, kp = jax.random.split(key)
    # Spatial must be 2x2 (AvgPool2d(2) gate broadcast) and Cin == Cout (conv2 input).
    B, C, H, W = 2, 4, 2, 2
    x = jax.random.normal(kx, (B, C, H, W), dtype=jnp.float32)
    params = init_fim_params(kp, C)

    out = fim_block_pallas(x, params)
    jax.block_until_ready(out)

    ref = fim_block_ref(x, params)
    assert out.shape == (B, C, H, W)
    np.testing.assert_allclose(np.asarray(out), np.asarray(ref), rtol=1e-4, atol=1e-5)
    print("KERNEL_OK")
</pallas_src>

<mosaic_0001>
module attributes {stable_mosaic.version = 11 : i64} {
  func.func @fim_kernel(%arg0: i32, %arg1: memref<1x4x4xf32, #tpu.memory_space<vmem>>, %arg2: memref<9x4x4xf32, #tpu.memory_space<vmem>>, %arg3: memref<9x1x4xf32, #tpu.memory_space<vmem>>, %arg4: memref<1x4xf32, #tpu.memory_space<vmem>>, %arg5: memref<1x4xf32, #tpu.memory_space<vmem>>, %arg6: memref<4x4xf32, #tpu.memory_space<vmem>>, %arg7: memref<1x4xf32, #tpu.memory_space<vmem>>, %arg8: memref<1x4xf32, #tpu.memory_space<vmem>>, %arg9: memref<4x4xf32, #tpu.memory_space<vmem>>, %arg10: memref<1x4xf32, #tpu.memory_space<vmem>>, %arg11: memref<4x4xf32, #tpu.memory_space<vmem>>, %arg12: memref<1x4xf32, #tpu.memory_space<vmem>>, %arg13: memref<1x4x4xf32, #tpu.memory_space<vmem>>) attributes {dimension_semantics = [#tpu.dimension_semantics<parallel>], iteration_bounds = array<i64: 2>, scalar_prefetch = 0 : i64, scratch_operands = 0 : i64, tpu.core_type = #tpu.core_type<tc>, window_params = [{transform_indices = @transform_0, window_bounds = array<i64: 1, 4, 4>}, {pipeline_mode = #tpu.pipeline_mode<synchronous>, transform_indices = @transform_1, window_bounds = array<i64: 9, 4, 4>}, {pipeline_mode = #tpu.pipeline_mode<synchronous>, transform_indices = @transform_2, window_bounds = array<i64: 9, 1, 4>}, {pipeline_mode = #tpu.pipeline_mode<synchronous>, transform_indices = @transform_3, window_bounds = array<i64: 1, 4>}, {pipeline_mode = #tpu.pipeline_mode<synchronous>, transform_indices = @transform_4, window_bounds = array<i64: 1, 4>}, {pipeline_mode = #tpu.pipeline_mode<synchronous>, transform_indices = @transform_5, window_bounds = array<i64: 4, 4>}, {pipeline_mode = #tpu.pipeline_mode<synchronous>, transform_indices = @transform_6, window_bounds = array<i64: 1, 4>}, {pipeline_mode = #tpu.pipeline_mode<synchronous>, transform_indices = @transform_7, window_bounds = array<i64: 1, 4>}, {pipeline_mode = #tpu.pipeline_mode<synchronous>, transform_indices = @transform_8, window_bounds = array<i64: 4, 4>}, {pipeline_mode = #tpu.pipeline_mode<synchronous>, transform_indices = @transform_9, window_bounds = array<i64: 1, 4>}, {pipeline_mode = #tpu.pipeline_mode<synchronous>, transform_indices = @transform_10, window_bounds = array<i64: 4, 4>}, {pipeline_mode = #tpu.pipeline_mode<synchronous>, transform_indices = @transform_11, window_bounds = array<i64: 1, 4>}, {transform_indices = @transform_12, window_bounds = array<i64: 1, 4, 4>}]} {
    %c0 = arith.constant 0 : index
    %c0_0 = arith.constant 0 : index
    %c0_1 = arith.constant 0 : index
    %0 = vector.load %arg1[%c0, %c0_0, %c0_1] : memref<1x4x4xf32, #tpu.memory_space<vmem>>, vector<1x4x4xf32>
    %1 = vector.shape_cast %0 : vector<1x4x4xf32> to vector<4x4xf32>
    %cst = arith.constant 0.000000e+00 : f32
    %2 = vector.broadcast %cst : f32 to vector<4x4xf32>
    %c0_2 = arith.constant 0 : index
    %c0_3 = arith.constant 0 : index
    %c0_4 = arith.constant 0 : index
    %3 = vector.load %arg2[%c0_2, %c0_3, %c0_4] : memref<9x4x4xf32, #tpu.memory_space<vmem>>, vector<1x4x4xf32>
    %4 = vector.shape_cast %3 : vector<1x4x4xf32> to vector<4x4xf32>
    %cst_5 = arith.constant dense<0.000000e+00> : vector<4x4xf32>
    %5 = tpu.matmul %4, %1, %cst_5 {dimension_numbers = #tpu.dot_dimension_numbers<[1], [0], [0], [1], [0, 0, 1, 1], [], []>} : vector<4x4xf32>, vector<4x4xf32>, vector<4x4xf32> -> vector<4x4xf32>
    %c0_6 = arith.constant 0 : index
    %c0_7 = arith.constant 0 : index
    %c0_8 = arith.constant 0 : index
    %6 = vector.load %arg3[%c0_6, %c0_7, %c0_8] : memref<9x1x4xf32, #tpu.memory_space<vmem>>, vector<1x1x4xf32>
    %7 = vector.shape_cast %6 : vector<1x1x4xf32> to vector<1x4xf32>
    %8 = vector.broadcast %7 : vector<1x4xf32> to vector<4x4xf32>
    %9 = arith.mulf %5, %8 : vector<4x4xf32>
    %10 = arith.addf %2, %9 : vector<4x4xf32>
    %c1 = arith.constant 1 : index
    %c0_9 = arith.constant 0 : index
    %c0_10 = arith.constant 0 : index
    %11 = vector.load %arg2[%c1, %c0_9, %c0_10] : memref<9x4x4xf32, #tpu.memory_space<vmem>>, vector<1x4x4xf32>
    %12 = vector.shape_cast %11 : vector<1x4x4xf32> to vector<4x4xf32>
    %cst_11 = arith.constant dense<0.000000e+00> : vector<4x4xf32>
    %13 = tpu.matmul %12, %1, %cst_11 {dimension_numbers = #tpu.dot_dimension_numbers<[1], [0], [0], [1], [0, 0, 1, 1], [], []>} : vector<4x4xf32>, vector<4x4xf32>, vector<4x4xf32> -> vector<4x4xf32>
    %c1_12 = arith.constant 1 : index
    %c0_13 = arith.constant 0 : index
    %c0_14 = arith.constant 0 : index
    %14 = vector.load %arg3[%c1_12, %c0_13, %c0_14] : memref<9x1x4xf32, #tpu.memory_space<vmem>>, vector<1x1x4xf32>
    %15 = vector.shape_cast %14 : vector<1x1x4xf32> to vector<1x4xf32>
    %16 = vector.broadcast %15 : vector<1x4xf32> to vector<4x4xf32>
    %17 = arith.mulf %13, %16 : vector<4x4xf32>
    %18 = arith.addf %10, %17 : vector<4x4xf32>
    %c2 = arith.constant 2 : index
    %c0_15 = arith.constant 0 : index
    %c0_16 = arith.constant 0 : index
    %19 = vector.load %arg2[%c2, %c0_15, %c0_16] : memref<9x4x4xf32, #tpu.memory_space<vmem>>, vector<1x4x4xf32>
    %20 = vector.shape_cast %19 : vector<1x4x4xf32> to vector<4x4xf32>
    %cst_17 = arith.constant dense<0.000000e+00> : vector<4x4xf32>
    %21 = tpu.matmul %20, %1, %cst_17 {dimension_numbers = #tpu.dot_dimension_numbers<[1], [0], [0], [1], [0, 0, 1, 1], [], []>} : vector<4x4xf32>, vector<4x4xf32>, vector<4x4xf32> -> vector<4x4xf32>
    %c2_18 = arith.constant 2 : index
    %c0_19 = arith.constant 0 : index
    %c0_20 = arith.constant 0 : index
    %22 = vector.load %arg3[%c2_18, %c0_19, %c0_20] : memref<9x1x4xf32, #tpu.memory_space<vmem>>, vector<1x1x4xf32>
    %23 = vector.shape_cast %22 : vector<1x1x4xf32> to vector<1x4xf32>
    %24 = vector.broadcast %23 : vector<1x4xf32> to vector<4x4xf32>
    %25 = arith.mulf %21, %24 : vector<4x4xf32>
    %26 = arith.addf %18, %25 : vector<4x4xf32>
    %c3 = arith.constant 3 : index
    %c0_21 = arith.constant 0 : index
    %c0_22 = arith.constant 0 : index
    %27 = vector.load %arg2[%c3, %c0_21, %c0_22] : memref<9x4x4xf32, #tpu.memory_space<vmem>>, vector<1x4x4xf32>
    %28 = vector.shape_cast %27 : vector<1x4x4xf32> to vector<4x4xf32>
    %cst_23 = arith.constant dense<0.000000e+00> : vector<4x4xf32>
    %29 = tpu.matmul %28, %1, %cst_23 {dimension_numbers = #tpu.dot_dimension_numbers<[1], [0], [0], [1], [0, 0, 1, 1], [], []>} : vector<4x4xf32>, vector<4x4xf32>, vector<4x4xf32> -> vector<4x4xf32>
    %c3_24 = arith.constant 3 : index
    %c0_25 = arith.constant 0 : index
    %c0_26 = arith.constant 0 : index
    %30 = vector.load %arg3[%c3_24, %c0_25, %c0_26] : memref<9x1x4xf32, #tpu.memory_space<vmem>>, vector<1x1x4xf32>
    %31 = vector.shape_cast %30 : vector<1x1x4xf32> to vector<1x4xf32>
    %32 = vector.broadcast %31 : vector<1x4xf32> to vector<4x4xf32>
    %33 = arith.mulf %29, %32 : vector<4x4xf32>
    %34 = arith.addf %26, %33 : vector<4x4xf32>
    %c4 = arith.constant 4 : index
    %c0_27 = arith.constant 0 : index
    %c0_28 = arith.constant 0 : index
    %35 = vector.load %arg2[%c4, %c0_27, %c0_28] : memref<9x4x4xf32, #tpu.memory_space<vmem>>, vector<1x4x4xf32>
    %36 = vector.shape_cast %35 : vector<1x4x4xf32> to vector<4x4xf32>
    %cst_29 = arith.constant dense<0.000000e+00> : vector<4x4xf32>
    %37 = tpu.matmul %36, %1, %cst_29 {dimension_numbers = #tpu.dot_dimension_numbers<[1], [0], [0], [1], [0, 0, 1, 1], [], []>} : vector<4x4xf32>, vector<4x4xf32>, vector<4x4xf32> -> vector<4x4xf32>
    %c4_30 = arith.constant 4 : index
    %c0_31 = arith.constant 0 : index
    %c0_32 = arith.constant 0 : index
    %38 = vector.load %arg3[%c4_30, %c0_31, %c0_32] : memref<9x1x4xf32, #tpu.memory_space<vmem>>, vector<1x1x4xf32>
    %39 = vector.shape_cast %38 : vector<1x1x4xf32> to vector<1x4xf32>
    %40 = vector.broadcast %39 : vector<1x4xf32> to vector<4x4xf32>
    %41 = arith.mulf %37, %40 : vector<4x4xf32>
    %42 = arith.addf %34, %41 : vector<4x4xf32>
    %c5 = arith.constant 5 : index
    %c0_33 = arith.constant 0 : index
    %c0_34 = arith.constant 0 : index
    %43 = vector.load %arg2[%c5, %c0_33, %c0_34] : memref<9x4x4xf32, #tpu.memory_space<vmem>>, vector<1x4x4xf32>
    %44 = vector.shape_cast %43 : vector<1x4x4xf32> to vector<4x4xf32>
    %cst_35 = arith.constant dense<0.000000e+00> : vector<4x4xf32>
    %45 = tpu.matmul %44, %1, %cst_35 {dimension_numbers = #tpu.dot_dimension_numbers<[1], [0], [0], [1], [0, 0, 1, 1], [], []>} : vector<4x4xf32>, vector<4x4xf32>, vector<4x4xf32> -> vector<4x4xf32>
    %c5_36 = arith.constant 5 : index
    %c0_37 = arith.constant 0 : index
    %c0_38 = arith.constant 0 : index
    %46 = vector.load %arg3[%c5_36, %c0_37, %c0_38] : memref<9x1x4xf32, #tpu.memory_space<vmem>>, vector<1x1x4xf32>
    %47 = vector.shape_cast %46 : vector<1x1x4xf32> to vector<1x4xf32>
    %48 = vector.broadcast %47 : vector<1x4xf32> to vector<4x4xf32>
    %49 = arith.mulf %45, %48 : vector<4x4xf32>
    %50 = arith.addf %42, %49 : vector<4x4xf32>
    %c6 = arith.constant 6 : index
    %c0_39 = arith.constant 0 : index
    %c0_40 = arith.constant 0 : index
    %51 = vector.load %arg2[%c6, %c0_39, %c0_40] : memref<9x4x4xf32, #tpu.memory_space<vmem>>, vector<1x4x4xf32>
    %52 = vector.shape_cast %51 : vector<1x4x4xf32> to vector<4x4xf32>
    %cst_41 = arith.constant dense<0.000000e+00> : vector<4x4xf32>
    %53 = tpu.matmul %52, %1, %cst_41 {dimension_numbers = #tpu.dot_dimension_numbers<[1], [0], [0], [1], [0, 0, 1, 1], [], []>} : vector<4x4xf32>, vector<4x4xf32>, vector<4x4xf32> -> vector<4x4xf32>
    %c6_42 = arith.constant 6 : index
    %c0_43 = arith.constant 0 : index
    %c0_44 = arith.constant 0 : index
    %54 = vector.load %arg3[%c6_42, %c0_43, %c0_44] : memref<9x1x4xf32, #tpu.memory_space<vmem>>, vector<1x1x4xf32>
    %55 = vector.shape_cast %54 : vector<1x1x4xf32> to vector<1x4xf32>
    %56 = vector.broadcast %55 : vector<1x4xf32> to vector<4x4xf32>
    %57 = arith.mulf %53, %56 : vector<4x4xf32>
    %58 = arith.addf %50, %57 : vector<4x4xf32>
    %c7 = arith.constant 7 : index
    %c0_45 = arith.constant 0 : index
    %c0_46 = arith.constant 0 : index
    %59 = vector.load %arg2[%c7, %c0_45, %c0_46] : memref<9x4x4xf32, #tpu.memory_space<vmem>>, vector<1x4x4xf32>
    %60 = vector.shape_cast %59 : vector<1x4x4xf32> to vector<4x4xf32>
    %cst_47 = arith.constant dense<0.000000e+00> : vector<4x4xf32>
    %61 = tpu.matmul %60, %1, %cst_47 {dimension_numbers = #tpu.dot_dimension_numbers<[1], [0], [0], [1], [0, 0, 1, 1], [], []>} : vector<4x4xf32>, vector<4x4xf32>, vector<4x4xf32> -> vector<4x4xf32>
    %c7_48 = arith.constant 7 : index
    %c0_49 = arith.constant 0 : index
    %c0_50 = arith.constant 0 : index
    %62 = vector.load %arg3[%c7_48, %c0_49, %c0_50] : memref<9x1x4xf32, #tpu.memory_space<vmem>>, vector<1x1x4xf32>
    %63 = vector.shape_cast %62 : vector<1x1x4xf32> to vector<1x4xf32>
    %64 = vector.broadcast %63 : vector<1x4xf32> to vector<4x4xf32>
    %65 = arith.mulf %61, %64 : vector<4x4xf32>
    %66 = arith.addf %58, %65 : vector<4x4xf32>
    %c8 = arith.constant 8 : index
    %c0_51 = arith.constant 0 : index
    %c0_52 = arith.constant 0 : index
    %67 = vector.load %arg2[%c8, %c0_51, %c0_52] : memref<9x4x4xf32, #tpu.memory_space<vmem>>, vector<1x4x4xf32>
    %68 = vector.shape_cast %67 : vector<1x4x4xf32> to vector<4x4xf32>
    %cst_53 = arith.constant dense<0.000000e+00> : vector<4x4xf32>
    %69 = tpu.matmul %68, %1, %cst_53 {dimension_numbers = #tpu.dot_dimension_numbers<[1], [0], [0], [1], [0, 0, 1, 1], [], []>} : vector<4x4xf32>, vector<4x4xf32>, vector<4x4xf32> -> vector<4x4xf32>
    %c8_54 = arith.constant 8 : index
    %c0_55 = arith.constant 0 : index
    %c0_56 = arith.constant 0 : index
    %70 = vector.load %arg3[%c8_54, %c0_55, %c0_56] : memref<9x1x4xf32, #tpu.memory_space<vmem>>, vector<1x1x4xf32>
    %71 = vector.shape_cast %70 : vector<1x1x4xf32> to vector<1x4xf32>
    %72 = vector.broadcast %71 : vector<1x4xf32> to vector<4x4xf32>
    %73 = arith.mulf %69, %72 : vector<4x4xf32>
    %74 = arith.addf %66, %73 : vector<4x4xf32>
    %c0_57 = arith.constant 0 : index
    %c0_58 = arith.constant 0 : index
    %75 = vector.load %arg4[%c0_57, %c0_58] : memref<1x4xf32, #tpu.memory_space<vmem>>, vector<1x4xf32>
    %76 = vector.broadcast %75 : vector<1x4xf32> to vector<4x4xf32>
    %77 = arith.mulf %74, %76 : vector<4x4xf32>
    %c0_59 = arith.constant 0 : index
    %c0_60 = arith.constant 0 : index
    %78 = vector.load %arg5[%c0_59, %c0_60] : memref<1x4xf32, #tpu.memory_space<vmem>>, vector<1x4xf32>
    %79 = vector.broadcast %78 : vector<1x4xf32> to vector<4x4xf32>
    %80 = arith.addf %77, %79 : vector<4x4xf32>
    %cst_61 = arith.constant 0.000000e+00 : f32
    %cst_62 = arith.constant 6.000000e+00 : f32
    %81 = vector.broadcast %cst_61 : f32 to vector<4x4xf32>
    %82 = arith.maximumf %81, %80 : vector<4x4xf32>
    %83 = vector.broadcast %cst_62 : f32 to vector<4x4xf32>
    %84 = arith.minimumf %83, %82 : vector<4x4xf32>
    %c0_63 = arith.constant 0 : index
    %c0_64 = arith.constant 0 : index
    %85 = vector.load %arg6[%c0_63, %c0_64] : memref<4x4xf32, #tpu.memory_space<vmem>>, vector<4x4xf32>
    %cst_65 = arith.constant dense<0.000000e+00> : vector<4x4xf32>
    %86 = tpu.matmul %84, %85, %cst_65 {dimension_numbers = #tpu.dot_dimension_numbers<[1], [0], [0], [1], [0, 0, 1, 1], [], []>} : vector<4x4xf32>, vector<4x4xf32>, vector<4x4xf32> -> vector<4x4xf32>
    %c0_66 = arith.constant 0 : index
    %c0_67 = arith.constant 0 : index
    %87 = vector.load %arg7[%c0_66, %c0_67] : memref<1x4xf32, #tpu.memory_space<vmem>>, vector<1x4xf32>
    %88 = vector.broadcast %87 : vector<1x4xf32> to vector<4x4xf32>
    %89 = arith.mulf %86, %88 : vector<4x4xf32>
    %c0_68 = arith.constant 0 : index
    %c0_69 = arith.constant 0 : index
    %90 = vector.load %arg8[%c0_68, %c0_69] : memref<1x4xf32, #tpu.memory_space<vmem>>, vector<1x4xf32>
    %91 = vector.broadcast %90 : vector<1x4xf32> to vector<4x4xf32>
    %92 = arith.addf %89, %91 : vector<4x4xf32>
    %cst_70 = arith.constant 0.000000e+00 : f32
    %cst_71 = arith.constant 6.000000e+00 : f32
    %93 = vector.broadcast %cst_70 : f32 to vector<4x4xf32>
    %94 = arith.maximumf %93, %92 : vector<4x4xf32>
    %95 = vector.broadcast %cst_71 : f32 to vector<4x4xf32>
    %96 = arith.minimumf %95, %94 : vector<4x4xf32>
    %97 = arith.addf %1, %96 : vector<4x4xf32>
    %c0_72 = arith.constant 0 : index
    %c0_73 = arith.constant 0 : index
    %98 = vector.load %arg9[%c0_72, %c0_73] : memref<4x4xf32, #tpu.memory_space<vmem>>, vector<4x4xf32>
    %cst_74 = arith.constant dense<0.000000e+00> : vector<4x4xf32>
    %99 = tpu.matmul %97, %98, %cst_74 {dimension_numbers = #tpu.dot_dimension_numbers<[1], [0], [0], [1], [0, 0, 1, 1], [], []>} : vector<4x4xf32>, vector<4x4xf32>, vector<4x4xf32> -> vector<4x4xf32>
    %c0_75 = arith.constant 0 : index
    %c0_76 = arith.constant 0 : index
    %100 = vector.load %arg10[%c0_75, %c0_76] : memref<1x4xf32, #tpu.memory_space<vmem>>, vector<1x4xf32>
    %101 = vector.broadcast %100 : vector<1x4xf32> to vector<4x4xf32>
    %102 = arith.addf %99, %101 : vector<4x4xf32>
    %cst_77 = arith.constant dense<0.000000e+00> : vector<4xf32>
    %103 = vector.multi_reduction <add>, %102, %cst_77 [0] : vector<4x4xf32> to vector<4xf32>
    %104 = vector.shape_cast %103 : vector<4xf32> to vector<1x4xf32>
    %cst_78 = arith.constant 4.000000e+00 : f32
    %105 = vector.broadcast %cst_78 : f32 to vector<1x4xf32>
    %106 = arith.divf %104, %105 : vector<1x4xf32>
    %cst_79 = arith.constant 0.000000e+00 : f32
    %107 = vector.broadcast %cst_79 : f32 to vector<1x4xf32>
    %108 = arith.subf %107, %106 : vector<1x4xf32>
    %109 = math.exp %108 : vector<1x4xf32>
    %cst_80 = arith.constant 1.000000e+00 : f32
    %110 = vector.broadcast %cst_80 : f32 to vector<1x4xf32>
    %111 = arith.addf %110, %109 : vector<1x4xf32>
    %cst_81 = arith.constant 1.000000e+00 : f32
    %112 = vector.broadcast %cst_81 : f32 to vector<1x4xf32>
    %113 = arith.divf %112, %111 : vector<1x4xf32>
    %114 = vector.broadcast %113 : vector<1x4xf32> to vector<4x4xf32>
    %115 = arith.mulf %102, %114 : vector<4x4xf32>
    %c0_82 = arith.constant 0 : index
    %c0_83 = arith.constant 0 : index
    %116 = vector.load %arg11[%c0_82, %c0_83] : memref<4x4xf32, #tpu.memory_space<vmem>>, vector<4x4xf32>
    %cst_84 = arith.constant dense<0.000000e+00> : vector<4x4xf32>
    %117 = tpu.matmul %115, %116, %cst_84 {dimension_numbers = #tpu.dot_dimension_numbers<[1], [0], [0], [1], [0, 0, 1, 1], [], []>} : vector<4x4xf32>, vector<4x4xf32>, vector<4x4xf32> -> vector<4x4xf32>
    %c0_85 = arith.constant 0 : index
    %c0_86 = arith.constant 0 : index
    %118 = vector.load %arg12[%c0_85, %c0_86] : memref<1x4xf32, #tpu.memory_space<vmem>>, vector<1x4xf32>
    %119 = vector.broadcast %118 : vector<1x4xf32> to vector<4x4xf32>
    %120 = arith.addf %117, %119 : vector<4x4xf32>
    %c0_87 = arith.constant 0 : index
    %c0_88 = arith.constant 0 : index
    %c0_89 = arith.constant 0 : index
    %121 = vector.load %arg13[%c0_87, %c0_88, %c0_89] : memref<1x4x4xf32, #tpu.memory_space<vmem>>, vector<1x4x4xf32>
    %122 = vector.shape_cast %121 : vector<1x4x4xf32> to vector<4x4xf32>
    %123 = vector.shape_cast %120 : vector<4x4xf32> to vector<1x4x4xf32>
    tpu.vector_store %arg13[%c0_87, %c0_88, %c0_89], %123 {strides = array<i32>} : memref<1x4x4xf32, #tpu.memory_space<vmem>>, vector<1x4x4xf32>,
    return
  }
  func.func @transform_0(%arg0: i32) -> (i32, i32, i32) {
    %c0_i32 = arith.constant 0 : i32
    %c0_i32_0 = arith.constant 0 : i32
    %c0_i32_1 = arith.constant 0 : i32
    return %arg0, %c0_i32, %c0_i32_0 : i32, i32, i32
  }
  func.func @transform_1(%arg0: i32) -> (i32, i32, i32) {
    %c0_i32 = arith.constant 0 : i32
    %c0_i32_0 = arith.constant 0 : i32
    %c0_i32_1 = arith.constant 0 : i32
    %c0_i32_2 = arith.constant 0 : i32
    return %c0_i32, %c0_i32_0, %c0_i32_1 : i32, i32, i32
  }
  func.func @transform_2(%arg0: i32) -> (i32, i32, i32) {
    %c0_i32 = arith.constant 0 : i32
    %c0_i32_0 = arith.constant 0 : i32
    %c0_i32_1 = arith.constant 0 : i32
    %c0_i32_2 = arith.constant 0 : i32
    return %c0_i32, %c0_i32_0, %c0_i32_1 : i32, i32, i32
  }
  func.func @transform_3(%arg0: i32) -> (i32, i32) {
    %c0_i32 = arith.constant 0 : i32
    %c0_i32_0 = arith.constant 0 : i32
    %c0_i32_1 = arith.constant 0 : i32
    return %c0_i32, %c0_i32_0 : i32, i32
  }
  func.func @transform_4(%arg0: i32) -> (i32, i32) {
    %c0_i32 = arith.constant 0 : i32
    %c0_i32_0 = arith.constant 0 : i32
    %c0_i32_1 = arith.constant 0 : i32
    return %c0_i32, %c0_i32_0 : i32, i32
  }
  func.func @transform_5(%arg0: i32) -> (i32, i32) {
    %c0_i32 = arith.constant 0 : i32
    %c0_i32_0 = arith.constant 0 : i32
    %c0_i32_1 = arith.constant 0 : i32
    return %c0_i32, %c0_i32_0 : i32, i32
  }
  func.func @transform_6(%arg0: i32) -> (i32, i32) {
    %c0_i32 = arith.constant 0 : i32
    %c0_i32_0 = arith.constant 0 : i32
    %c0_i32_1 = arith.constant 0 : i32
    return %c0_i32, %c0_i32_0 : i32, i32
  }
  func.func @transform_7(%arg0: i32) -> (i32, i32) {
    %c0_i32 = arith.constant 0 : i32
    %c0_i32_0 = arith.constant 0 : i32
    %c0_i32_1 = arith.constant 0 : i32
    return %c0_i32, %c0_i32_0 : i32, i32
  }
  func.func @transform_8(%arg0: i32) -> (i32, i32) {
    %c0_i32 = arith.constant 0 : i32
    %c0_i32_0 = arith.constant 0 : i32
    %c0_i32_1 = arith.constant 0 : i32
    return %c0_i32, %c0_i32_0 : i32, i32
  }
  func.func @transform_9(%arg0: i32) -> (i32, i32) {
    %c0_i32 = arith.constant 0 : i32
    %c0_i32_0 = arith.constant 0 : i32
    %c0_i32_1 = arith.constant 0 : i32
    return %c0_i32, %c0_i32_0 : i32, i32
  }
  func.func @transform_10(%arg0: i32) -> (i32, i32) {
    %c0_i32 = arith.constant 0 : i32
    %c0_i32_0 = arith.constant 0 : i32
    %c0_i32_1 = arith.constant 0 : i32
    return %c0_i32, %c0_i32_0 : i32, i32
  }
  func.func @transform_11(%arg0: i32) -> (i32, i32) {
    %c0_i32 = arith.constant 0 : i32
    %c0_i32_0 = arith.constant 0 : i32
    %c0_i32_1 = arith.constant 0 : i32
    return %c0_i32, %c0_i32_0 : i32, i32
  }
  func.func @transform_12(%arg0: i32) -> (i32, i32, i32) {
    %c0_i32 = arith.constant 0 : i32
    %c0_i32_0 = arith.constant 0 : i32
    %c0_i32_1 = arith.constant 0 : i32
    return %arg0, %c0_i32, %c0_i32_0 : i32, i32, i32
  }
}

</mosaic_0001>

<llo_original>
// kernel: tpu_custom_call.1
$region0: #{tpu_custom_call.1}
  #allocation0 [shape = 'u32[]', space=smem, size = 0x4, offset = 0x4, fixed_abs, tag = 'smem constant byte address 0x4 - core index']
  #allocation1 [shape = 'u32[144,128]{1,0:T(1,128)}', space=vmem, size = 0x12000, scoped, tag = 'internal scratch']
  %s0 = inlined_call_operand.vmem [shape: f32[2,4,4], index: 0, kind: input, shape index: {}]
  %s1 = inlined_call_operand.vmem [shape: f32[9,4,4], index: 1, kind: input, shape index: {}]
  %s2 = inlined_call_operand.vmem [shape: f32[9,1,4], index: 2, kind: input, shape index: {}]
  %s3 = inlined_call_operand.vmem [shape: f32[1,4], index: 3, kind: input, shape index: {}]
  %s4 = inlined_call_operand.vmem [shape: f32[1,4], index: 4, kind: input, shape index: {}]
  %s5 = inlined_call_operand.vmem [shape: f32[4,4], index: 5, kind: input, shape index: {}]
  %s6 = inlined_call_operand.vmem [shape: f32[1,4], index: 6, kind: input, shape index: {}]
  %s7 = inlined_call_operand.vmem [shape: f32[1,4], index: 7, kind: input, shape index: {}]
  %s8 = inlined_call_operand.vmem [shape: f32[4,4], index: 8, kind: input, shape index: {}]
  %s9 = inlined_call_operand.vmem [shape: f32[1,4], index: 9, kind: input, shape index: {}]
  %s10 = inlined_call_operand.vmem [shape: f32[4,4], index: 10, kind: input, shape index: {}]
  %s11 = inlined_call_operand.vmem [shape: f32[1,4], index: 11, kind: input, shape index: {}]
  %s12 = inlined_call_operand.hbm [shape: f32[2,4,4], index: 12, kind: output, shape index: {}]
  %s13 = sld [smem:[#allocation0]]
  $region81: #{tpu_custom_call.1} parent=0
    _
  %s15 = ssub.s32 1, %s13
  %s16 = scalar_select 0, %s15, %s13
  $region1: #{tpu_custom_call.1} parent=0
    #allocation2 [shape = 'u8[4096]{0}', space=vmem, size = 0x1000, scoped, tag = 'output window, operand 0']
    #allocation3 [shape = 's32[2]{0}', space=sflag, size = 0x8, scoped, tag = 'scoped memory for tpu_custom_call.1']
    %17 = vsyncpa [#allocation3], 0
    %s18 = scalar_lea.sflag [#allocation3], 1
    %19 = vsyncpa %s18, 0
    loop: start=0, step=1, limit=4
    $region2: #{tpu_custom_call.1} parent=1 // loop_pre_header
      _
    $region3: #{tpu_custom_call.1} parent=1 // loop_header
      %s21 = sphi 0, %s25
      %p22 = scmp.ge.s32.totalorder %s21, 4
      %s31 = sphi 0, %s33
      %s34 = sphi 0, %s31
      %s35 = sphi 0, %s34
      %s51 = sphi 0, %s35
      %s55 = sphi 0, %s55
      %s57 = sphi 0, %s55
      %s58 = sphi 0, %s57
      %s72 = sphi 0, %s58
      %s76 = sphi 0, %s76
      %s78 = sphi 0, %s76
      %s79 = sphi 0, %s78
      %s93 = sphi 0, %s79
      %s97 = sphi 0, %s97
      %s99 = sphi 0, %s97
      %s100 = sphi 0, %s99
      %s114 = sphi 0, %s100
      %s118 = sphi 0, %s118
      %s120 = sphi 0, %s118
      %s121 = sphi 0, %s120
      %s135 = sphi 0, %s121
      %s139 = sphi 0, %s139
      %s141 = sphi 0, %s139
      %s142 = sphi 0, %s141
      %s156 = sphi 0, %s142
      %s160 = sphi 0, %s160
      %s162 = sphi 0, %s160
      %s163 = sphi 0, %s162
      %s177 = sphi 0, %s163
      %s181 = sphi 0, %s181
      %s183 = sphi 0, %s181
      %s184 = sphi 0, %s183
      %s198 = sphi 0, %s184
      %s202 = sphi 0, %s202
      %s204 = sphi 0, %s202
      %s205 = sphi 0, %s204
      %s219 = sphi 0, %s205
      %s223 = sphi 0, %s223
      %s225 = sphi 0, %s223
      %s226 = sphi 0, %s225
      %s240 = sphi 0, %s226
      %s244 = sphi 0, %s244
      %s246 = sphi 0, %s244
      %s247 = sphi 0, %s246
      %s261 = sphi 0, %s247
      %s265 = sphi 0, %s265
      %s267 = sphi 0, %s265
      %s268 = sphi 0, %s267
      %s282 = sphi 0, %s268
      %s288 = sphi 0, %s290
      %s291 = sphi 0, %s288
      %s292 = sphi 0, %s291
      %s308 = sphi 0, %s292
    $region4: #{tpu_custom_call.1} parent=1 // loop_header_branch
      %24 = sbr.rel (%p22) target = $region8
    $region5: #{tpu_custom_call.1} parent=1 // loop_body
      %s26 = ssub.s32 %s21, 1
      %s27 = ssub.s32 %s21, 2
      %s28 = sadd.s32 %s21, 1
      %s29 = ssub.s32 %s21, %s28
      %p30 = scmp.eq.s32.totalorder %s29, 0
      %s32 = sadd.s32 %s31, 1
      %s33 = scalar_select %p30, %s31, %s32
      %p36 = pneg %p30
      %p37 = scmp.eq.s32.totalorder %s21, 1
      %p38 = por %p36, %p37
      %p39 = scmp.ne.s32.totalorder %s31, %s34
      %p40 = scmp.eq.s32.totalorder %s21, 0
      %p41 = por %p39, %p40
      %p42 = scmp.ne.s32.totalorder %s31, %s34
      %p43 = scmp.eq.s32.totalorder %s26, 1
      %p44 = por %p42, %p43
      %p45 = scmp.ne.s32.totalorder %s34, %s35
      %p46 = scmp.eq.s32.totalorder %s26, 0
      %p47 = por %p45, %p46
      %p48 = scmp.ne.s32.totalorder %s34, %s35
      %p49 = scmp.eq.s32.totalorder %s27, 1
      %p50 = por %p48, %p49
      %p52 = scmp.ne.s32.totalorder %s35, %s51
      %p53 = scmp.eq.s32.totalorder %s27, 0
      %p54 = por %p52, %p53
      %s56 = sadd.s32 %s55, 1
      %p59 = scmp.eq.s32.totalorder %s21, 1
      %p60 = scmp.ne.s32.totalorder %s55, %s57
      %p61 = scmp.eq.s32.totalorder %s21, 0
      %p62 = por %p60, %p61
      %p63 = scmp.ne.s32.totalorder %s55, %s57
      %p64 = scmp.eq.s32.totalorder %s26, 1
      %p65 = por %p63, %p64
      %p66 = scmp.ne.s32.totalorder %s57, %s58
      %p67 = scmp.eq.s32.totalorder %s26, 0
      %p68 = por %p66, %p67
      %p69 = scmp.ne.s32.totalorder %s57, %s58
      %p70 = scmp.eq.s32.totalorder %s27, 1
      %p71 = por %p69, %p70
      %p73 = scmp.ne.s32.totalorder %s58, %s72
      %p74 = scmp.eq.s32.totalorder %s27, 0
      %p75 = por %p73, %p74
      %s77 = sadd.s32 %s76, 1
      %p80 = scmp.eq.s32.totalorder %s21, 1
      %p81 = scmp.ne.s32.totalorder %s76, %s78
      %p82 = scmp.eq.s32.totalorder %s21, 0
      %p83 = por %p81, %p82
      %p84 = scmp.ne.s32.totalorder %s76, %s78
      %p85 = scmp.eq.s32.totalorder %s26, 1
      %p86 = por %p84, %p85
      %p87 = scmp.ne.s32.totalorder %s78, %s79
      %p88 = scmp.eq.s32.totalorder %s26, 0
      %p89 = por %p87, %p88
      %p90 = scmp.ne.s32.totalorder %s78, %s79
      %p91 = scmp.eq.s32.totalorder %s27, 1
      %p92 = por %p90, %p91
      %p94 = scmp.ne.s32.totalorder %s79, %s93
      %p95 = scmp.eq.s32.totalorder %s27, 0
      %p96 = por %p94, %p95
      %s98 = sadd.s32 %s97, 1
      %p101 = scmp.eq.s32.totalorder %s21, 1
      %p102 = scmp.ne.s32.totalorder %s97, %s99
      %p103 = scmp.eq.s32.totalorder %s21, 0
      %p104 = por %p102, %p103
      %p105 = scmp.ne.s32.totalorder %s97, %s99
      %p106 = scmp.eq.s32.totalorder %s26, 1
      %p107 = por %p105, %p106
      %p108 = scmp.ne.s32.totalorder %s99, %s100
      %p109 = scmp.eq.s32.totalorder %s26, 0
      %p110 = por %p108, %p109
      %p111 = scmp.ne.s32.totalorder %s99, %s100
      %p112 = scmp.eq.s32.totalorder %s27, 1
      %p113 = por %p111, %p112
      %p115 = scmp.ne.s32.totalorder %s100, %s114
      %p116 = scmp.eq.s32.totalorder %s27, 0
      %p117 = por %p115, %p116
      %s119 = sadd.s32 %s118, 1
      %p122 = scmp.eq.s32.totalorder %s21, 1
      %p123 = scmp.ne.s32.totalorder %s118, %s120
      %p124 = scmp.eq.s32.totalorder %s21, 0
      %p125 = por %p123, %p124
      %p126 = scmp.ne.s32.totalorder %s118, %s120
      %p127 = scmp.eq.s32.totalorder %s26, 1
      %p128 = por %p126, %p127
      %p129 = scmp.ne.s32.totalorder %s120, %s121
      %p130 = scmp.eq.s32.totalorder %s26, 0
      %p131 = por %p129, %p130
      %p132 = scmp.ne.s32.totalorder %s120, %s121
      %p133 = scmp.eq.s32.totalorder %s27, 1
      %p134 = por %p132, %p133
      %p136 = scmp.ne.s32.totalorder %s121, %s135
      %p137 = scmp.eq.s32.totalorder %s27, 0
      %p138 = por %p136, %p137
      %s140 = sadd.s32 %s139, 1
      %p143 = scmp.eq.s32.totalorder %s21, 1
      %p144 = scmp.ne.s32.totalorder %s139, %s141
      %p145 = scmp.eq.s32.totalorder %s21, 0
      %p146 = por %p144, %p145
      %p147 = scmp.ne.s32.totalorder %s139, %s141
      %p148 = scmp.eq.s32.totalorder %s26, 1
      %p149 = por %p147, %p148
      %p150 = scmp.ne.s32.totalorder %s141, %s142
      %p151 = scmp.eq.s32.totalorder %s26, 0
      %p152 = por %p150, %p151
      %p153 = scmp.ne.s32.totalorder %s141, %s142
      %p154 = scmp.eq.s32.totalorder %s27, 1
      %p155 = por %p153, %p154
      %p157 = scmp.ne.s32.totalorder %s142, %s156
      %p158 = scmp.eq.s32.totalorder %s27, 0
      %p159 = por %p157, %p158
      %s161 = sadd.s32 %s160, 1
      %p164 = scmp.eq.s32.totalorder %s21, 1
      %p165 = scmp.ne.s32.totalorder %s160, %s162
      %p166 = scmp.eq.s32.totalorder %s21, 0
      %p167 = por %p165, %p166
      %p168 = scmp.ne.s32.totalorder %s160, %s162
      %p169 = scmp.eq.s32.totalorder %s26, 1
      %p170 = por %p168, %p169
      %p171 = scmp.ne.s32.totalorder %s162, %s163
      %p172 = scmp.eq.s32.totalorder %s26, 0
      %p173 = por %p171, %p172
      %p174 = scmp.ne.s32.totalorder %s162, %s163
      %p175 = scmp.eq.s32.totalorder %s27, 1
      %p176 = por %p174, %p175
      %p178 = scmp.ne.s32.totalorder %s163, %s177
      %p179 = scmp.eq.s32.totalorder %s27, 0
      %p180 = por %p178, %p179
      %s182 = sadd.s32 %s181, 1
      %p185 = scmp.eq.s32.totalorder %s21, 1
      %p186 = scmp.ne.s32.totalorder %s181, %s183
      %p187 = scmp.eq.s32.totalorder %s21, 0
      %p188 = por %p186, %p187
      %p189 = scmp.ne.s32.totalorder %s181, %s183
      %p190 = scmp.eq.s32.totalorder %s26, 1
      %p191 = por %p189, %p190
      %p192 = scmp.ne.s32.totalorder %s183, %s184
      %p193 = scmp.eq.s32.totalorder %s26, 0
      %p194 = por %p192, %p193
      %p195 = scmp.ne.s32.totalorder %s183, %s184
      %p196 = scmp.eq.s32.totalorder %s27, 1
      %p197 = por %p195, %p196
      %p199 = scmp.ne.s32.totalorder %s184, %s198
      %p200 = scmp.eq.s32.totalorder %s27, 0
      %p201 = por %p199, %p200
      %s203 = sadd.s32 %s202, 1
      %p206 = scmp.eq.s32.totalorder %s21, 1
      %p207 = scmp.ne.s32.totalorder %s202, %s204
      %p208 = scmp.eq.s32.totalorder %s21, 0
      %p209 = por %p207, %p208
      %p210 = scmp.ne.s32.totalorder %s202, %s204
      %p211 = scmp.eq.s32.totalorder %s26, 1
      %p212 = por %p210, %p211
      %p213 = scmp.ne.s32.totalorder %s204, %s205
      %p214 = scmp.eq.s32.totalorder %s26, 0
      %p215 = por %p213, %p214
      %p216 = scmp.ne.s32.totalorder %s204, %s205
      %p217 = scmp.eq.s32.totalorder %s27, 1
      %p218 = por %p216, %p217
      %p220 = scmp.ne.s32.totalorder %s205, %s219
      %p221 = scmp.eq.s32.totalorder %s27, 0
      %p222 = por %p220, %p221
      %s224 = sadd.s32 %s223, 1
      %p227 = scmp.eq.s32.totalorder %s21, 1
      %p228 = scmp.ne.s32.totalorder %s223, %s225
      %p229 = scmp.eq.s32.totalorder %s21, 0
      %p230 = por %p228, %p229
      %p231 = scmp.ne.s32.totalorder %s223, %s225
      %p232 = scmp.eq.s32.totalorder %s26, 1
      %p233 = por %p231, %p232
      %p234 = scmp.ne.s32.totalorder %s225, %s226
      %p235 = scmp.eq.s32.totalorder %s26, 0
      %p236 = por %p234, %p235
      %p237 = scmp.ne.s32.totalorder %s225, %s226
      %p238 = scmp.eq.s32.totalorder %s27, 1
      %p239 = por %p237, %p238
      %p241 = scmp.ne.s32.totalorder %s226, %s240
      %p242 = scmp.eq.s32.totalorder %s27, 0
      %p243 = por %p241, %p242
      %s245 = sadd.s32 %s244, 1
      %p248 = scmp.eq.s32.totalorder %s21, 1
      %p249 = scmp.ne.s32.totalorder %s244, %s246
      %p250 = scmp.eq.s32.totalorder %s21, 0
      %p251 = por %p249, %p250
      %p252 = scmp.ne.s32.totalorder %s244, %s246
      %p253 = scmp.eq.s32.totalorder %s26, 1
      %p254 = por %p252, %p253
      %p255 = scmp.ne.s32.totalorder %s246, %s247
      %p256 = scmp.eq.s32.totalorder %s26, 0
      %p257 = por %p255, %p256
      %p258 = scmp.ne.s32.totalorder %s246, %s247
      %p259 = scmp.eq.s32.totalorder %s27, 1
      %p260 = por %p258, %p259
      %p262 = scmp.ne.s32.totalorder %s247, %s261
      %p263 = scmp.eq.s32.totalorder %s27, 0
      %p264 = por %p262, %p263
      %s266 = sadd.s32 %s265, 1
      %p269 = scmp.eq.s32.totalorder %s21, 1
      %p270 = scmp.ne.s32.totalorder %s265, %s267
      %p271 = scmp.eq.s32.totalorder %s21, 0
      %p272 = por %p270, %p271
      %p273 = scmp.ne.s32.totalorder %s265, %s267
      %p274 = scmp.eq.s32.totalorder %s26, 1
      %p275 = por %p273, %p274
      %p276 = scmp.ne.s32.totalorder %s267, %s268
      %p277 = scmp.eq.s32.totalorder %s26, 0
      %p278 = por %p276, %p277
      %p279 = scmp.ne.s32.totalorder %s267, %s268
      %p280 = scmp.eq.s32.totalorder %s27, 1
      %p281 = por %p279, %p280
      %p283 = scmp.ne.s32.totalorder %s268, %s282
      %p284 = scmp.eq.s32.totalorder %s27, 0
      %p285 = por %p283, %p284
      %s286 = ssub.s32 %s21, %s28
      %p287 = scmp.eq.s32.totalorder %s286, 0
      %s289 = sadd.s32 %s288, 1
      %s290 = scalar_select %p287, %s288, %s289
      %p293 = pneg %p287
      %p294 = scmp.eq.s32.totalorder %s21, 1
      %p295 = por %p293, %p294
      %p296 = scmp.ne.s32.totalorder %s288, %s291
      %p297 = scmp.eq.s32.totalorder %s21, 0
      %p298 = por %p296, %p297
      %p299 = scmp.ne.s32.totalorder %s288, %s291
      %p300 = scmp.eq.s32.totalorder %s26, 1
      %p301 = por %p299, %p300
      %p302 = scmp.ne.s32.totalorder %s291, %s292
      %p303 = scmp.eq.s32.totalorder %s26, 0
      %p304 = por %p302, %p303
      %p305 = scmp.ne.s32.totalorder %s291, %s292
      %p306 = scmp.eq.s32.totalorder %s27, 1
      %p307 = por %p305, %p306
      %p309 = scmp.ne.s32.totalorder %s292, %s308
      %p310 = scmp.eq.s32.totalorder %s27, 0
      %p311 = por %p309, %p310
      %p312 = scmp.le.s32.totalorder 1, %s21
      %p313 = scmp.lt.s32.totalorder %s21, 3
      %p314 = pnand %p312, %p313
      %p315 = pneg %p314
      // Predicated region
      $region9: #{tpu_custom_call.1} parent=5 // pred_check
        _
      $region10: #{tpu_custom_call.1} parent=5 // pred_check_branch
        %317 = sbr.rel (%p314) target = $region12
      $region11: #{tpu_custom_call.1} parent=5 // pred_region
        %s318 = ssub.s32 %s21, 1
        // Predicated region
        $region13: #{tpu_custom_call.1} parent=11 // pred_check
          %p319 = pneg %p68
        $region14: #{tpu_custom_call.1} parent=11 // pred_check_branch
          %321 = sbr.rel (%p319) target = $region16
        $region15: #{tpu_custom_call.1} parent=11 // pred_region
          _
        $region16: #{tpu_custom_call.1} parent=11 // pred_fallthru
          _
        // Predicated region
        $region17: #{tpu_custom_call.1} parent=11 // pred_check
          %p322 = pneg %p89
        $region18: #{tpu_custom_call.1} parent=11 // pred_check_branch
          %324 = sbr.rel (%p322) target = $region20
        $region19: #{tpu_custom_call.1} parent=11 // pred_region
          _
        $region20: #{tpu_custom_call.1} parent=11 // pred_fallthru
          _
        // Predicated region
        $region21: #{tpu_custom_call.1} parent=11 // pred_check
          %p325 = pneg %p110
        $region22: #{tpu_custom_call.1} parent=11 // pred_check_branch
          %327 = sbr.rel (%p325) target = $region24
        $region23: #{tpu_custom_call.1} parent=11 // pred_region
          _
        $region24: #{tpu_custom_call.1} parent=11 // pred_fallthru
          _
        // Predicated region
        $region25: #{tpu_custom_call.1} parent=11 // pred_check
          %p328 = pneg %p131
        $region26: #{tpu_custom_call.1} parent=11 // pred_check_branch
          %330 = sbr.rel (%p328) target = $region28
        $region27: #{tpu_custom_call.1} parent=11 // pred_region
          _
        $region28: #{tpu_custom_call.1} parent=11 // pred_fallthru
          _
        // Predicated region
        $region29: #{tpu_custom_call.1} parent=11 // pred_check
          %p331 = pneg %p152
        $region30: #{tpu_custom_call.1} parent=11 // pred_check_branch
          %333 = sbr.rel (%p331) target = $region32
        $region31: #{tpu_custom_call.1} parent=11 // pred_region
          _
        $region32: #{tpu_custom_call.1} parent=11 // pred_fallthru
          _
        // Predicated region
        $region33: #{tpu_custom_call.1} parent=11 // pred_check
          %p334 = pneg %p173
        $region34: #{tpu_custom_call.1} parent=11 // pred_check_branch
          %336 = sbr.rel (%p334) target = $region36
        $region35: #{tpu_custom_call.1} parent=11 // pred_region
          _
        $region36: #{tpu_custom_call.1} parent=11 // pred_fallthru
          _
        // Predicated region
        $region37: #{tpu_custom_call.1} parent=11 // pred_check
          %p337 = pneg %p194
        $region38: #{tpu_custom_call.1} parent=11 // pred_check_branch
          %339 = sbr.rel (%p337) target = $region40
        $region39: #{tpu_custom_call.1} parent=11 // pred_region
          _
        $region40: #{tpu_custom_call.1} parent=11 // pred_fallthru
          _
        // Predicated region
        $region41: #{tpu_custom_call.1} parent=11 // pred_check
          %p340 = pneg %p215
        $region42: #{tpu_custom_call.1} parent=11 // pred_check_branch
          %342 = sbr.rel (%p340) target = $region44
        $region43: #{tpu_custom_call.1} parent=11 // pred_region
          _
        $region44: #{tpu_custom_call.1} parent=11 // pred_fallthru
          _
        // Predicated region
        $region45: #{tpu_custom_call.1} parent=11 // pred_check
          %p343 = pneg %p236
        $region46: #{tpu_custom_call.1} parent=11 // pred_check_branch
          %345 = sbr.rel (%p343) target = $region48
        $region47: #{tpu_custom_call.1} parent=11 // pred_region
          _
        $region48: #{tpu_custom_call.1} parent=11 // pred_fallthru
          _
        // Predicated region
        $region49: #{tpu_custom_call.1} parent=11 // pred_check
          %p346 = pneg %p257
        $region50: #{tpu_custom_call.1} parent=11 // pred_check_branch
          %348 = sbr.rel (%p346) target = $region52
        $region51: #{tpu_custom_call.1} parent=11 // pred_region
          _
        $region52: #{tpu_custom_call.1} parent=11 // pred_fallthru
          _
        // Predicated region
        $region53: #{tpu_custom_call.1} parent=11 // pred_check
          %p349 = pneg %p278
        $region54: #{tpu_custom_call.1} parent=11 // pred_check_branch
          %351 = sbr.rel (%p349) target = $region56
        $region55: #{tpu_custom_call.1} parent=11 // pred_region
          _
        $region56: #{tpu_custom_call.1} parent=11 // pred_fallthru
          _
      $region12: #{tpu_custom_call.1} parent=5 // pred_fallthru
        _
      %p352 = scmp.lt.s32.totalorder %s21, 2
      // Predicated region
      $region57: #{tpu_custom_call.1} parent=5 // pred_check
        %p353 = pneg %p352
      $region58: #{tpu_custom_call.1} parent=5 // pred_check_branch
        %355 = sbr.rel (%p353) target = $region60
      $region59: #{tpu_custom_call.1} parent=5 // pred_region
        // Predicated region
        $region61: #{tpu_custom_call.1} parent=59 // pred_check
          %p356 = pneg %p41
        $region62: #{tpu_custom_call.1} parent=59 // pred_check_branch
          %358 = sbr.rel (%p356) target = $region64
        $region63: #{tpu_custom_call.1} parent=59 // pred_region
          %p359 = scmp.lt.s32.totalorder %s21, 1
          %s360 = scalar_select %p359, %s21, 1
          %s361 = smul.addr %s360, 4
          %s362 = scalar_lea.vmem %s0, %s361
        $region64: #{tpu_custom_call.1} parent=59 // pred_fallthru
          _
      $region60: #{tpu_custom_call.1} parent=5 // pred_fallthru
        _
      %p363 = scmp.le.s32.totalorder 1, %s21
      %p364 = scmp.lt.s32.totalorder %s21, 3
      %p365 = pnand %p363, %p364
      %p366 = pneg %p365
      // Predicated region
      $region65: #{tpu_custom_call.1} parent=5 // pred_check
        _
      $region66: #{tpu_custom_call.1} parent=5 // pred_check_branch
        %368 = sbr.rel (%p365) target = $region68
      $region67: #{tpu_custom_call.1} parent=5 // pred_region
        %s369 = ssub.s32 %s21, 1
        %p370 = scmp.lt.s32.totalorder %s26, 1
        %s371 = scalar_select %p370, %s26, 1
        %s372 = smul.addr %s371, 4
        %s373 = scalar_lea.vmem %s0, %s372
        %p374 = pneg %p47
        %p375 = pneg %p44
        %p376 = pneg %p68
        %p377 = pneg %p65
        %p378 = pneg %p89
        %p379 = pneg %p86
        %p380 = pneg %p110
        %p381 = pneg %p107
        %p382 = pneg %p131
        %p383 = pneg %p128
        %p384 = pneg %p152
        %p385 = pneg %p149
        %p386 = pneg %p173
        %p387 = pneg %p170
        %p388 = pneg %p194
        %p389 = pneg %p191
        %p390 = pneg %p215
        %p391 = pneg %p212
        %p392 = pneg %p236
        %p393 = pneg %p233
        %p394 = pneg %p257
        %p395 = pneg %p254
        %p396 = pneg %p278
        %p397 = pneg %p275
        %p398 = pneg %p304
        %p399 = pneg %p301
        %s400 = sand.u32 %s291, 1
        %s401 = scalar_lea.sflag [#allocation3], %s400
        %s402 = sand.u32 %s291, 1
        %s403 = smul.addr %s402, 4
        %s404 = scalar_lea.vmem [#allocation2], %s403
        %p405 = scmp.lt.s32.totalorder %s26, 1
        %s406 = scalar_select %p405, %s26, 1
        %s407 = smul.addr %s406, 4
        %s408 = scalar_lea.vmem %s0, %s407
        %v409 = vld [vmem:[%s408] sm:$0xf]
        %v410 = vld [vmem:[%s1] sm:$0xf]
        %vm411 = vcmask 31744
        %v413 = vsel %vm411, %v410, 0
        %vm415 = vcmask 1043456
        %v417 = vsel %vm415, %v409, 0
        %419 = vmatprep.subr.mxu0 0.0
        %420 = vmatpush1.msra.mxu0 %v417
        %421 = vmatprep.subr.mxu0 0.0
        %422 = vmatpush1.msra.mxu0 0.0
        %423 = vmatprep.subr.mxu0 0.0
        %424 = vmatpush1.msra.mxu0 0.0
        %425 = vmatprep.subr.mxu0 0.0
        %426 = vmatpush1.msra.mxu0 0.0
        %427 = vmatprep.subr.mxu0 0.0
        %428 = vmatpush1.msra.mxu0 0.0
        %429 = vmatprep.subr.mxu0 0.0
        %430 = vmatpush1.msra.mxu0 0.0
        %431 = vmatprep.subr.mxu0 0.0
        %432 = vmatpush1.msra.mxu0 0.0
        %433 = vmatprep.subr.mxu0 0.0
        %434 = vmatpush1.msra.mxu0 0.0
        %435 = vmatprep.subr.mxu0 0.0
        %436 = vmatpush1.msra.mxu0 0.0
        %437 = vmatprep.subr.mxu0 0.0
        %438 = vmatpush1.msra.mxu0 0.0
        %439 = vmatprep.subr.mxu0 0.0
        %440 = vmatpush1.msra.mxu0 0.0
        %441 = vmatprep.subr.mxu0 0.0
        %442 = vmatpush1.msra.mxu0 0.0
        %443 = vmatprep.subr.mxu0 0.0
        %444 = vmatpush1.msra.mxu0 0.0
        %445 = vmatprep.subr.mxu0 0.0
        %446 = vmatpush1.msra.mxu0 0.0
        %447 = vmatprep.subr.mxu0 0.0
        %448 = vmatpush1.msra.mxu0 0.0
        %449 = vmatprep.subr.mxu0 0.0
        %450 = vmatpush1.msra.mxu0 0.0
        %451 = vmatprep.subr.mxu0 0.0
        %452 = vmatpush1.msra.mxu0 0.0
        %453 = vmatprep.subr.mxu0 0.0
        %454 = vmatpush1.msra.mxu0 0.0
        %455 = vmatprep.subr.mxu0 0.0
        %456 = vmatpush1.msra.mxu0 0.0
        %457 = vmatprep.subr.mxu0 0.0
        %458 = vmatpush1.msra.mxu0 0.0
        %459 = vmatprep.subr.mxu0 0.0
        %460 = vmatpush1.msra.mxu0 0.0
        %461 = vmatprep.subr.mxu0 0.0
        %462 = vmatpush1.msra.mxu0 0.0
        %463 = vmatprep.subr.mxu0 0.0
        %464 = vmatpush1.msra.mxu0 0.0
        %465 = vmatprep.subr.mxu0 0.0
        %466 = vmatpush1.msra.mxu0 0.0
        %467 = vmatprep.subr.mxu0 0.0
        %468 = vmatpush1.msra.mxu0 0.0
        %469 = vmatprep.subr.mxu0 0.0
        %470 = vmatpush1.msra.mxu0 0.0
        %471 = vmatprep.subr.mxu0 0.0
        %472 = vmatpush1.msra.mxu0 0.0
        %473 = vmatprep.subr.mxu0 0.0
        %474 = vmatpush1.msra.mxu0 0.0
        %475 = vmatprep.subr.mxu0 0.0
        %476 = vmatpush1.msra.mxu0 0.0
        %477 = vmatprep.subr.mxu0 0.0
        %478 = vmatpush1.msra.mxu0 0.0
        %479 = vmatprep.subr.mxu0 0.0
        %480 = vmatpush1.msra.mxu0 0.0
        %481 = vmatprep.subr.mxu0 0.0
        %482 = vmatpush1.msra.mxu0 0.0
        %483 = vmatprep.mubr.f32.mxu0 0.0
        %484 = vmatmul.mubr.f32.gmra.mrb[0].mxu0 %v413
        %v485 = vpop.f32.mrb[0].mxu0
        %v486 = vadd.f32 0.0, %v485
        %v487 = vpop.f32.mrb[0].mxu0
        %488 = vdwg.mxu0
        %v489 = vld [vmem:[%s2] sm:$0x1]
        %v491 = vlaneseq
        %v492 = vshrl.u32 %v491, 7
        %v493 = vsub.s32 0, %v492
        %v494 = vrot.slane %v489, %v493
        %v496 = vmul.f32 %v486, %v494
        %v497 = vadd.f32 %v496, 0.0
        %s498 = scalar_lea.vmem %s1, 4
        %v499 = vld [vmem:[%s498] sm:$0xf]
        %v501 = vsel %vm411, %v499, 0
        %503 = vmatprep.subr.mxu0 0.0
        %504 = vmatpush1.msra.mxu0 %v417
        %505 = vmatprep.subr.mxu0 0.0
        %506 = vmatpush1.msra.mxu0 0.0
        %507 = vmatprep.subr.mxu0 0.0
        %508 = vmatpush1.msra.mxu0 0.0
        %509 = vmatprep.subr.mxu0 0.0
        %510 = vmatpush1.msra.mxu0 0.0
        %511 = vmatprep.subr.mxu0 0.0
        %512 = vmatpush1.msra.mxu0 0.0
        %513 = vmatprep.subr.mxu0 0.0
        %514 = vmatpush1.msra.mxu0 0.0
        %515 = vmatprep.subr.mxu0 0.0
        %516 = vmatpush1.msra.mxu0 0.0
        %517 = vmatprep.subr.mxu0 0.0
        %518 = vmatpush1.msra.mxu0 0.0
        %519 = vmatprep.subr.mxu0 0.0
        %520 = vmatpush1.msra.mxu0 0.0
        %521 = vmatprep.subr.mxu0 0.0
        %522 = vmatpush1.msra.mxu0 0.0
        %523 = vmatprep.subr.mxu0 0.0
        %524 = vmatpush1.msra.mxu0 0.0
        %525 = vmatprep.subr.mxu0 0.0
        %526 = vmatpush1.msra.mxu0 0.0
        %527 = vmatprep.subr.mxu0 0.0
        %528 = vmatpush1.msra.mxu0 0.0
        %529 = vmatprep.subr.mxu0 0.0
        %530 = vmatpush1.msra.mxu0 0.0
        %531 = vmatprep.subr.mxu0 0.0
        %532 = vmatpush1.msra.mxu0 0.0
        %533 = vmatprep.subr.mxu0 0.0
        %534 = vmatpush1.msra.mxu0 0.0
        %535 = vmatprep.subr.mxu0 0.0
        %536 = vmatpush1.msra.mxu0 0.0
        %537 = vmatprep.subr.mxu0 0.0
        %538 = vmatpush1.msra.mxu0 0.0
        %539 = vmatprep.subr.mxu0 0.0
        %540 = vmatpush1.msra.mxu0 0.0
        %541 = vmatprep.subr.mxu0 0.0
        %542 = vmatpush1.msra.mxu0 0.0
        %543 = vmatprep.subr.mxu0 0.0
        %544 = vmatpush1.msra.mxu0 0.0
        %545 = vmatprep.subr.mxu0 0.0
        %546 = vmatpush1.msra.mxu0 0.0
        %547 = vmatprep.subr.mxu0 0.0
        %548 = vmatpush1.msra.mxu0 0.0
        %549 = vmatprep.subr.mxu0 0.0
        %550 = vmatpush1.msra.mxu0 0.0
        %551 = vmatprep.subr.mxu0 0.0
        %552 = vmatpush1.msra.mxu0 0.0
        %553 = vmatprep.subr.mxu0 0.0
        %554 = vmatpush1.msra.mxu0 0.0
        %555 = vmatprep.subr.mxu0 0.0
        %556 = vmatpush1.msra.mxu0 0.0
        %557 = vmatprep.subr.mxu0 0.0
        %558 = vmatpush1.msra.mxu0 0.0
        %559 = vmatprep.subr.mxu0 0.0
        %560 = vmatpush1.msra.mxu0 0.0
        %561 = vmatprep.subr.mxu0 0.0
        %562 = vmatpush1.msra.mxu0 0.0
        %563 = vmatprep.subr.mxu0 0.0
        %564 = vmatpush1.msra.mxu0 0.0
        %565 = vmatprep.subr.mxu0 0.0
        %566 = vmatpush1.msra.mxu0 0.0
        %567 = vmatprep.mubr.f32.mxu0 0.0
        %568 = vmatmul.mubr.f32.gmra.mrb[0].mxu0 %v501
        %v569 = vpop.f32.mrb[0].mxu0
        %v570 = vadd.f32 0.0, %v569
        %v571 = vpop.f32.mrb[0].mxu0
        %572 = vdwg.mxu0
        %s573 = scalar_lea.vmem %s2, 1
        %v574 = vld [vmem:[%s573] sm:$0x1]
        %v576 = vlaneseq
        %v577 = vshrl.u32 %v576, 7
        %v578 = vsub.s32 0, %v577
        %v579 = vrot.slane %v574, %v578
        %v581 = vmul.f32 %v570, %v579
        %v582 = vadd.f32 %v497, %v581
        %s583 = scalar_lea.vmem %s1, 8
        %v584 = vld [vmem:[%s583] sm:$0xf]
        %v586 = vsel %vm411, %v584, 0
        %588 = vmatprep.subr.mxu0 0.0
        %589 = vmatpush1.msra.mxu0 %v417
        %590 = vmatprep.subr.mxu0 0.0
        %591 = vmatpush1.msra.mxu0 0.0
        %592 = vmatprep.subr.mxu0 0.0
        %593 = vmatpush1.msra.mxu0 0.0
        %594 = vmatprep.subr.mxu0 0.0
        %595 = vmatpush1.msra.mxu0 0.0
        %596 = vmatprep.subr.mxu0 0.0
        %597 = vmatpush1.msra.mxu0 0.0
        %598 = vmatprep.subr.mxu0 0.0
        %599 = vmatpush1.msra.mxu0 0.0
        %600 = vmatprep.subr.mxu0 0.0
        %601 = vmatpush1.msra.mxu0 0.0
        %602 = vmatprep.subr.mxu0 0.0
        %603 = vmatpush1.msra.mxu0 0.0
        %604 = vmatprep.subr.mxu0 0.0
        %605 = vmatpush1.msra.mxu0 0.0
        %606 = vmatprep.subr.mxu0 0.0
        %607 = vmatpush1.msra.mxu0 0.0
        %608 = vmatprep.subr.mxu0 0.0
        %609 = vmatpush1.msra.mxu0 0.0
        %610 = vmatprep.subr.mxu0 0.0
        %611 = vmatpush1.msra.mxu0 0.0
        %612 = vmatprep.subr.mxu0 0.0
        %613 = vmatpush1.msra.mxu0 0.0
        %614 = vmatprep.subr.mxu0 0.0
        %615 = vmatpush1.msra.mxu0 0.0
        %616 = vmatprep.subr.mxu0 0.0
        %617 = vmatpush1.msra.mxu0 0.0
        %618 = vmatprep.subr.mxu0 0.0
        %619 = vmatpush1.msra.mxu0 0.0
        %620 = vmatprep.subr.mxu0 0.0
        %621 = vmatpush1.msra.mxu0 0.0
        %622 = vmatprep.subr.mxu0 0.0
        %623 = vmatpush1.msra.mxu0 0.0
        %624 = vmatprep.subr.mxu0 0.0
        %625 = vmatpush1.msra.mxu0 0.0
        %626 = vmatprep.subr.mxu0 0.0
        %627 = vmatpush1.msra.mxu0 0.0
        %628 = vmatprep.subr.mxu0 0.0
        %629 = vmatpush1.msra.mxu0 0.0
        %630 = vmatprep.subr.mxu0 0.0
        %631 = vmatpush1.msra.mxu0 0.0
        %632 = vmatprep.subr.mxu0 0.0
        %633 = vmatpush1.msra.mxu0 0.0
        %634 = vmatprep.subr.mxu0 0.0
        %635 = vmatpush1.msra.mxu0 0.0
        %636 = vmatprep.subr.mxu0 0.0
        %637 = vmatpush1.msra.mxu0 0.0
        %638 = vmatprep.subr.mxu0 0.0
        %639 = vmatpush1.msra.mxu0 0.0
        %640 = vmatprep.subr.mxu0 0.0
        %641 = vmatpush1.msra.mxu0 0.0
        %642 = vmatprep.subr.mxu0 0.0
        %643 = vmatpush1.msra.mxu0 0.0
        %644 = vmatprep.subr.mxu0 0.0
        %645 = vmatpush1.msra.mxu0 0.0
        %646 = vmatprep.subr.mxu0 0.0
        %647 = vmatpush1.msra.mxu0 0.0
        %648 = vmatprep.subr.mxu0 0.0
        %649 = vmatpush1.msra.mxu0 0.0
        %650 = vmatprep.subr.mxu0 0.0
        %651 = vmatpush1.msra.mxu0 0.0
        %652 = vmatprep.mubr.f32.mxu0 0.0
        %653 = vmatmul.mubr.f32.gmra.mrb[0].mxu0 %v586
        %v654 = vpop.f32.mrb[0].mxu0
        %v655 = vadd.f32 0.0, %v654
        %v656 = vpop.f32.mrb[0].mxu0
        %657 = vdwg.mxu0
        %s658 = scalar_lea.vmem %s2, 2
        %v659 = vld [vmem:[%s658] sm:$0x1]
        %v661 = vlaneseq
        %v662 = vshrl.u32 %v661, 7
        %v663 = vsub.s32 0, %v662
        %v664 = vrot.slane %v659, %v663
        %v666 = vmul.f32 %v655, %v664
        %v667 = vadd.f32 %v582, %v666
        %s668 = scalar_lea.vmem %s1, 12
        %v669 = vld [vmem:[%s668] sm:$0xf]
        %v671 = vsel %vm411, %v669, 0
        %673 = vmatprep.subr.mxu0 0.0
        %674 = vmatpush1.msra.mxu0 %v417
        %675 = vmatprep.subr.mxu0 0.0
        %676 = vmatpush1.msra.mxu0 0.0
        %677 = vmatprep.subr.mxu0 0.0
        %678 = vmatpush1.msra.mxu0 0.0
        %679 = vmatprep.subr.mxu0 0.0
        %680 = vmatpush1.msra.mxu0 0.0
        %681 = vmatprep.subr.mxu0 0.0
        %682 = vmatpush1.msra.mxu0 0.0
        %683 = vmatprep.subr.mxu0 0.0
        %684 = vmatpush1.msra.mxu0 0.0
        %685 = vmatprep.subr.mxu0 0.0
        %686 = vmatpush1.msra.mxu0 0.0
        %687 = vmatprep.subr.mxu0 0.0
        %688 = vmatpush1.msra.mxu0 0.0
        %689 = vmatprep.subr.mxu0 0.0
        %690 = vmatpush1.msra.mxu0 0.0
        %691 = vmatprep.subr.mxu0 0.0
        %692 = vmatpush1.msra.mxu0 0.0
        %693 = vmatprep.subr.mxu0 0.0
        %694 = vmatpush1.msra.mxu0 0.0
        %695 = vmatprep.subr.mxu0 0.0
        %696 = vmatpush1.msra.mxu0 0.0
        %697 = vmatprep.subr.mxu0 0.0
        %698 = vmatpush1.msra.mxu0 0.0
        %699 = vmatprep.subr.mxu0 0.0
        %700 = vmatpush1.msra.mxu0 0.0
        %701 = vmatprep.subr.mxu0 0.0
        %702 = vmatpush1.msra.mxu0 0.0
        %703 = vmatprep.subr.mxu0 0.0
        %704 = vmatpush1.msra.mxu0 0.0
        %705 = vmatprep.subr.mxu0 0.0
        %706 = vmatpush1.msra.mxu0 0.0
        %707 = vmatprep.subr.mxu0 0.0
        %708 = vmatpush1.msra.mxu0 0.0
        %709 = vmatprep.subr.mxu0 0.0
        %710 = vmatpush1.msra.mxu0 0.0
        %711 = vmatprep.subr.mxu0 0.0
        %712 = vmatpush1.msra.mxu0 0.0
        %713 = vmatprep.subr.mxu0 0.0
        %714 = vmatpush1.msra.mxu0 0.0
        %715 = vmatprep.subr.mxu0 0.0
        %716 = vmatpush1.msra.mxu0 0.0
        %717 = vmatprep.subr.mxu0 0.0
        %718 = vmatpush1.msra.mxu0 0.0
        %719 = vmatprep.subr.mxu0 0.0
        %720 = vmatpush1.msra.mxu0 0.0
        %721 = vmatprep.subr.mxu0 0.0
        %722 = vmatpush1.msra.mxu0 0.0
        %723 = vmatprep.subr.mxu0 0.0
        %724 = vmatpush1.msra.mxu0 0.0
        %725 = vmatprep.subr.mxu0 0.0
        %726 = vmatpush1.msra.mxu0 0.0
        %727 = vmatprep.subr.mxu0 0.0
        %728 = vmatpush1.msra.mxu0 0.0
        %729 = vmatprep.subr.mxu0 0.0
        %730 = vmatpush1.msra.mxu0 0.0
        %731 = vmatprep.subr.mxu0 0.0
        %732 = vmatpush1.msra.mxu0 0.0
        %733 = vmatprep.subr.mxu0 0.0
        %734 = vmatpush1.msra.mxu0 0.0
        %735 = vmatprep.subr.mxu0 0.0
        %736 = vmatpush1.msra.mxu0 0.0
        %737 = vmatprep.mubr.f32.mxu0 0.0
        %738 = vmatmul.mubr.f32.gmra.mrb[0].mxu0 %v671
        %v739 = vpop.f32.mrb[0].mxu0
        %v740 = vadd.f32 0.0, %v739
        %v741 = vpop.f32.mrb[0].mxu0
        %742 = vdwg.mxu0
        %s743 = scalar_lea.vmem %s2, 3
        %v744 = vld [vmem:[%s743] sm:$0x1]
        %v746 = vlaneseq
        %v747 = vshrl.u32 %v746, 7
        %v748 = vsub.s32 0, %v747
        %v749 = vrot.slane %v744, %v748
        %v751 = vmul.f32 %v740, %v749
        %v752 = vadd.f32 %v667, %v751
        %s753 = scalar_lea.vmem %s1, 16
        %v754 = vld [vmem:[%s753] sm:$0xf]
        %v756 = vsel %vm411, %v754, 0
        %758 = vmatprep.subr.mxu0 0.0
        %759 = vmatpush1.msra.mxu0 %v417
        %760 = vmatprep.subr.mxu0 0.0
        %761 = vmatpush1.msra.mxu0 0.0
        %762 = vmatprep.subr.mxu0 0.0
        %763 = vmatpush1.msra.mxu0 0.0
        %764 = vmatprep.subr.mxu0 0.0
        %765 = vmatpush1.msra.mxu0 0.0
        %766 = vmatprep.subr.mxu0 0.0
        %767 = vmatpush1.msra.mxu0 0.0
        %768 = vmatprep.subr.mxu0 0.0
        %769 = vmatpush1.msra.mxu0 0.0
        %770 = vmatprep.subr.mxu0 0.0
        %771 = vmatpush1.msra.mxu0 0.0
        %772 = vmatprep.subr.mxu0 0.0
        %773 = vmatpush1.msra.mxu0 0.0
        %774 = vmatprep.subr.mxu0 0.0
        %775 = vmatpush1.msra.mxu0 0.0
        %776 = vmatprep.subr.mxu0 0.0
        %777 = vmatpush1.msra.mxu0 0.0
        %778 = vmatprep.subr.mxu0 0.0
        %779 = vmatpush1.msra.mxu0 0.0
        %780 = vmatprep.subr.mxu0 0.0
        %781 = vmatpush1.msra.mxu0 0.0
        %782 = vmatprep.subr.mxu0 0.0
        %783 = vmatpush1.msra.mxu0 0.0
        %784 = vmatprep.subr.mxu0 0.0
        %785 = vmatpush1.msra.mxu0 0.0
        %786 = vmatprep.subr.mxu0 0.0
        %787 = vmatpush1.msra.mxu0 0.0
        %788 = vmatprep.subr.mxu0 0.0
        %789 = vmatpush1.msra.mxu0 0.0
        %790 = vmatprep.subr.mxu0 0.0
        %791 = vmatpush1.msra.mxu0 0.0
        %792 = vmatprep.subr.mxu0 0.0
        %793 = vmatpush1.msra.mxu0 0.0
        %794 = vmatprep.subr.mxu0 0.0
        %795 = vmatpush1.msra.mxu0 0.0
        %796 = vmatprep.subr.mxu0 0.0
        %797 = vmatpush1.msra.mxu0 0.0
        %798 = vmatprep.subr.mxu0 0.0
        %799 = vmatpush1.msra.mxu0 0.0
        %800 = vmatprep.subr.mxu0 0.0
        %801 = vmatpush1.msra.mxu0 0.0
        %802 = vmatprep.subr.mxu0 0.0
        %803 = vmatpush1.msra.mxu0 0.0
        %804 = vmatprep.subr.mxu0 0.0
        %805 = vmatpush1.msra.mxu0 0.0
        %806 = vmatprep.subr.mxu0 0.0
        %807 = vmatpush1.msra.mxu0 0.0
        %808 = vmatprep.subr.mxu0 0.0
        %809 = vmatpush1.msra.mxu0 0.0
        %810 = vmatprep.subr.mxu0 0.0
        %811 = vmatpush1.msra.mxu0 0.0
        %812 = vmatprep.subr.mxu0 0.0
        %813 = vmatpush1.msra.mxu0 0.0
        %814 = vmatprep.subr.mxu0 0.0
        %815 = vmatpush1.msra.mxu0 0.0
        %816 = vmatprep.subr.mxu0 0.0
        %817 = vmatpush1.msra.mxu0 0.0
        %818 = vmatprep.subr.mxu0 0.0
        %819 = vmatpush1.msra.mxu0 0.0
        %820 = vmatprep.subr.mxu0 0.0
        %821 = vmatpush1.msra.mxu0 0.0
        %822 = vmatprep.mubr.f32.mxu0 0.0
        %823 = vmatmul.mubr.f32.gmra.mrb[0].mxu0 %v756
        %v824 = vpop.f32.mrb[0].mxu0
        %v825 = vadd.f32 0.0, %v824
        %v826 = vpop.f32.mrb[0].mxu0
        %827 = vdwg.mxu0
        %s828 = scalar_lea.vmem %s2, 4
        %v829 = vld [vmem:[%s828] sm:$0x1]
        %v831 = vlaneseq
        %v832 = vshrl.u32 %v831, 7
        %v833 = vsub.s32 0, %v832
        %v834 = vrot.slane %v829, %v833
        %v836 = vmul.f32 %v825, %v834
        %v837 = vadd.f32 %v752, %v836
        %s838 = scalar_lea.vmem %s1, 20
        %v839 = vld [vmem:[%s838] sm:$0xf]
        %v841 = vsel %vm411, %v839, 0
        %843 = vmatprep.subr.mxu0 0.0
        %844 = vmatpush1.msra.mxu0 %v417
        %845 = vmatprep.subr.mxu0 0.0
        %846 = vmatpush1.msra.mxu0 0.0
        %847 = vmatprep.subr.mxu0 0.0
        %848 = vmatpush1.msra.mxu0 0.0
        %849 = vmatprep.subr.mxu0 0.0
        %850 = vmatpush1.msra.mxu0 0.0
        %851 = vmatprep.subr.mxu0 0.0
        %852 = vmatpush1.msra.mxu0 0.0
        %853 = vmatprep.subr.mxu0 0.0
        %854 = vmatpush1.msra.mxu0 0.0
        %855 = vmatprep.subr.mxu0 0.0
        %856 = vmatpush1.msra.mxu0 0.0
        %857 = vmatprep.subr.mxu0 0.0
        %858 = vmatpush1.msra.mxu0 0.0
        %859 = vmatprep.subr.mxu0 0.0
        %860 = vmatpush1.msra.mxu0 0.0
        %861 = vmatprep.subr.mxu0 0.0
        %862 = vmatpush1.msra.mxu0 0.0
        %863 = vmatprep.subr.mxu0 0.0
        %864 = vmatpush1.msra.mxu0 0.0
        %865 = vmatprep.subr.mxu0 0.0
        %866 = vmatpush1.msra.mxu0 0.0
        %867 = vmatprep.subr.mxu0 0.0
        %868 = vmatpush1.msra.mxu0 0.0
        %869 = vmatprep.subr.mxu0 0.0
        %870 = vmatpush1.msra.mxu0 0.0
        %871 = vmatprep.subr.mxu0 0.0
        %872 = vmatpush1.msra.mxu0 0.0
        %873 = vmatprep.subr.mxu0 0.0
        %874 = vmatpush1.msra.mxu0 0.0
        %875 = vmatprep.subr.mxu0 0.0
        %876 = vmatpush1.msra.mxu0 0.0
        %877 = vmatprep.subr.mxu0 0.0
        %878 = vmatpush1.msra.mxu0 0.0
        %879 = vmatprep.subr.mxu0 0.0
        %880 = vmatpush1.msra.mxu0 0.0
        %881 = vmatprep.subr.mxu0 0.0
        %882 = vmatpush1.msra.mxu0 0.0
        %883 = vmatprep.subr.mxu0 0.0
        %884 = vmatpush1.msra.mxu0 0.0
        %885 = vmatprep.subr.mxu0 0.0
        %886 = vmatpush1.msra.mxu0 0.0
        %887 = vmatprep.subr.mxu0 0.0
        %888 = vmatpush1.msra.mxu0 0.0
        %889 = vmatprep.subr.mxu0 0.0
        %890 = vmatpush1.msra.mxu0 0.0
        %891 = vmatprep.subr.mxu0 0.0
        %892 = vmatpush1.msra.mxu0 0.0
        %893 = vmatprep.subr.mxu0 0.0
        %894 = vmatpush1.msra.mxu0 0.0
        %895 = vmatprep.subr.mxu0 0.0
        %896 = vmatpush1.msra.mxu0 0.0
        %897 = vmatprep.subr.mxu0 0.0
        %898 = vmatpush1.msra.mxu0 0.0
        %899 = vmatprep.subr.mxu0 0.0
        %900 = vmatpush1.msra.mxu0 0.0
        %901 = vmatprep.subr.mxu0 0.0
        %902 = vmatpush1.msra.mxu0 0.0
        %903 = vmatprep.subr.mxu0 0.0
        %904 = vmatpush1.msra.mxu0 0.0
        %905 = vmatprep.subr.mxu0 0.0
        %906 = vmatpush1.msra.mxu0 0.0
        %907 = vmatprep.mubr.f32.mxu0 0.0
        %908 = vmatmul.mubr.f32.gmra.mrb[0].mxu0 %v841
        %v909 = vpop.f32.mrb[0].mxu0
        %v910 = vadd.f32 0.0, %v909
        %v911 = vpop.f32.mrb[0].mxu0
        %912 = vdwg.mxu0
        %s913 = scalar_lea.vmem %s2, 5
        %v914 = vld [vmem:[%s913] sm:$0x1]
        %v916 = vlaneseq
        %v917 = vshrl.u32 %v916, 7
        %v918 = vsub.s32 0, %v917
        %v919 = vrot.slane %v914, %v918
        %v921 = vmul.f32 %v910, %v919
        %v922 = vadd.f32 %v837, %v921
        %s923 = scalar_lea.vmem %s1, 24
        %v924 = vld [vmem:[%s923] sm:$0xf]
        %v926 = vsel %vm411, %v924, 0
        %928 = vmatprep.subr.mxu0 0.0
        %929 = vmatpush1.msra.mxu0 %v417
        %930 = vmatprep.subr.mxu0 0.0
        %931 = vmatpush1.msra.mxu0 0.0
        %932 = vmatprep.subr.mxu0 0.0
        %933 = vmatpush1.msra.mxu0 0.0
        %934 = vmatprep.subr.mxu0 0.0
        %935 = vmatpush1.msra.mxu0 0.0
        %936 = vmatprep.subr.mxu0 0.0
        %937 = vmatpush1.msra.mxu0 0.0
        %938 = vmatprep.subr.mxu0 0.0
        %939 = vmatpush1.msra.mxu0 0.0
        %940 = vmatprep.subr.mxu0 0.0
        %941 = vmatpush1.msra.mxu0 0.0
        %942 = vmatprep.subr.mxu0 0.0
        %943 = vmatpush1.msra.mxu0 0.0
        %944 = vmatprep.subr.mxu0 0.0
        %945 = vmatpush1.msra.mxu0 0.0
        %946 = vmatprep.subr.mxu0 0.0
        %947 = vmatpush1.msra.mxu0 0.0
        %948 = vmatprep.subr.mxu0 0.0
        %949 = vmatpush1.msra.mxu0 0.0
        %950 = vmatprep.subr.mxu0 0.0
        %951 = vmatpush1.msra.mxu0 0.0
        %952 = vmatprep.subr.mxu0 0.0
        %953 = vmatpush1.msra.mxu0 0.0
        %954 = vmatprep.subr.mxu0 0.0
        %955 = vmatpush1.msra.mxu0 0.0
        %956 = vmatprep.subr.mxu0 0.0
        %957 = vmatpush1.msra.mxu0 0.0
        %958 = vmatprep.subr.mxu0 0.0
        %959 = vmatpush1.msra.mxu0 0.0
        %960 = vmatprep.subr.mxu0 0.0
        %961 = vmatpush1.msra.mxu0 0.0
        %962 = vmatprep.subr.mxu0 0.0
        %963 = vmatpush1.msra.mxu0 0.0
        %964 = vmatprep.subr.mxu0 0.0
        %965 = vmatpush1.msra.mxu0 0.0
        %966 = vmatprep.subr.mxu0 0.0
        %967 = vmatpush1.msra.mxu0 0.0
        %968 = vmatprep.subr.mxu0 0.0
        %969 = vmatpush1.msra.mxu0 0.0
        %970 = vmatprep.subr.mxu0 0.0
        %971 = vmatpush1.msra.mxu0 0.0
        %972 = vmatprep.subr.mxu0 0.0
        %973 = vmatpush1.msra.mxu0 0.0
        %974 = vmatprep.subr.mxu0 0.0
        %975 = vmatpush1.msra.mxu0 0.0
        %976 = vmatprep.subr.mxu0 0.0
        %977 = vmatpush1.msra.mxu0 0.0
        %978 = vmatprep.subr.mxu0 0.0
        %979 = vmatpush1.msra.mxu0 0.0
        %980 = vmatprep.subr.mxu0 0.0
        %981 = vmatpush1.msra.mxu0 0.0
        %982 = vmatprep.subr.mxu0 0.0
        %983 = vmatpush1.msra.mxu0 0.0
        %984 = vmatprep.subr.mxu0 0.0
        %985 = vmatpush1.msra.mxu0 0.0
        %986 = vmatprep.subr.mxu0 0.0
        %987 = vmatpush1.msra.mxu0 0.0
        %988 = vmatprep.subr.mxu0 0.0
        %989 = vmatpush1.msra.mxu0 0.0
        %990 = vmatprep.subr.mxu0 0.0
        %991 = vmatpush1.msra.mxu0 0.0
        %992 = vmatprep.mubr.f32.mxu0 0.0
        %993 = vmatmul.mubr.f32.gmra.mrb[0].mxu0 %v926
        %v994 = vpop.f32.mrb[0].mxu0
        %v995 = vadd.f32 0.0, %v994
        %v996 = vpop.f32.mrb[0].mxu0
        %997 = vdwg.mxu0
        %s998 = scalar_lea.vmem %s2, 6
        %v999 = vld [vmem:[%s998] sm:$0x1]
        %v1001 = vlaneseq
        %v1002 = vshrl.u32 %v1001, 7
        %v1003 = vsub.s32 0, %v1002
        %v1004 = vrot.slane %v999, %v1003
        %v1006 = vmul.f32 %v995, %v1004
        %v1007 = vadd.f32 %v922, %v1006
        %s1008 = scalar_lea.vmem %s1, 28
        %v1009 = vld [vmem:[%s1008] sm:$0xf]
        %v1011 = vsel %vm411, %v1009, 0
        %1013 = vmatprep.subr.mxu0 0.0
        %1014 = vmatpush1.msra.mxu0 %v417
        %1015 = vmatprep.subr.mxu0 0.0
        %1016 = vmatpush1.msra.mxu0 0.0
        %1017 = vmatprep.subr.mxu0 0.0
        %1018 = vmatpush1.msra.mxu0 0.0
        %1019 = vmatprep.subr.mxu0 0.0
        %1020 = vmatpush1.msra.mxu0 0.0
        %1021 = vmatprep.subr.mxu0 0.0
        %1022 = vmatpush1.msra.mxu0 0.0
        %1023 = vmatprep.subr.mxu0 0.0
        %1024 = vmatpush1.msra.mxu0 0.0
        %1025 = vmatprep.subr.mxu0 0.0
        %1026 = vmatpush1.msra.mxu0 0.0
        %1027 = vmatprep.subr.mxu0 0.0
        %1028 = vmatpush1.msra.mxu0 0.0
        %1029 = vmatprep.subr.mxu0 0.0
        %1030 = vmatpush1.msra.mxu0 0.0
        %1031 = vmatprep.subr.mxu0 0.0
        %1032 = vmatpush1.msra.mxu0 0.0
        %1033 = vmatprep.subr.mxu0 0.0
        %1034 = vmatpush1.msra.mxu0 0.0
        %1035 = vmatprep.subr.mxu0 0.0
        %1036 = vmatpush1.msra.mxu0 0.0
        %1037 = vmatprep.subr.mxu0 0.0
        %1038 = vmatpush1.msra.mxu0 0.0
        %1039 = vmatprep.subr.mxu0 0.0
        %1040 = vmatpush1.msra.mxu0 0.0
        %1041 = vmatprep.subr.mxu0 0.0
        %1042 = vmatpush1.msra.mxu0 0.0
        %1043 = vmatprep.subr.mxu0 0.0
        %1044 = vmatpush1.msra.mxu0 0.0
        %1045 = vmatprep.subr.mxu0 0.0
        %1046 = vmatpush1.msra.mxu0 0.0
        %1047 = vmatprep.subr.mxu0 0.0
        %1048 = vmatpush1.msra.mxu0 0.0
        %1049 = vmatprep.subr.mxu0 0.0
        %1050 = vmatpush1.msra.mxu0 0.0
        %1051 = vmatprep.subr.mxu0 0.0
        %1052 = vmatpush1.msra.mxu0 0.0
        %1053 = vmatprep.subr.mxu0 0.0
        %1054 = vmatpush1.msra.mxu0 0.0
        %1055 = vmatprep.subr.mxu0 0.0
        %1056 = vmatpush1.msra.mxu0 0.0
        %1057 = vmatprep.subr.mxu0 0.0
        %1058 = vmatpush1.msra.mxu0 0.0
        %1059 = vmatprep.subr.mxu0 0.0
        %1060 = vmatpush1.msra.mxu0 0.0
        %1061 = vmatprep.subr.mxu0 0.0
        %1062 = vmatpush1.msra.mxu0 0.0
        %1063 = vmatprep.subr.mxu0 0.0
        %1064 = vmatpush1.msra.mxu0 0.0
        %1065 = vmatprep.subr.mxu0 0.0
        %1066 = vmatpush1.msra.mxu0 0.0
        %1067 = vmatprep.subr.mxu0 0.0
        %1068 = vmatpush1.msra.mxu0 0.0
        %1069 = vmatprep.subr.mxu0 0.0
        %1070 = vmatpush1.msra.mxu0 0.0
        %1071 = vmatprep.subr.mxu0 0.0
        %1072 = vmatpush1.msra.mxu0 0.0
        %1073 = vmatprep.subr.mxu0 0.0
        %1074 = vmatpush1.msra.mxu0 0.0
        %1075 = vmatprep.subr.mxu0 0.0
        %1076 = vmatpush1.msra.mxu0 0.0
        %1077 = vmatprep.mubr.f32.mxu0 0.0
        %1078 = vmatmul.mubr.f32.gmra.mrb[0].mxu0 %v1011
        %v1079 = vpop.f32.mrb[0].mxu0
        %v1080 = vadd.f32 0.0, %v1079
        %v1081 = vpop.f32.mrb[0].mxu0
        %1082 = vdwg.mxu0
        %s1083 = scalar_lea.vmem %s2, 7
        %v1084 = vld [vmem:[%s1083] sm:$0x1]
        %v1086 = vlaneseq
        %v1087 = vshrl.u32 %v1086, 7
        %v1088 = vsub.s32 0, %v1087
        %v1089 = vrot.slane %v1084, %v1088
        %v1091 = vmul.f32 %v1080, %v1089
        %v1092 = vadd.f32 %v1007, %v1091
        %s1093 = scalar_lea.vmem %s1, 32
        %v1094 = vld [vmem:[%s1093] sm:$0xf]
        %v1096 = vsel %vm411, %v1094, 0
        %1098 = vmatprep.subr.mxu0 0.0
        %1099 = vmatpush1.msra.mxu0 %v417
        %1100 = vmatprep.subr.mxu0 0.0
        %1101 = vmatpush1.msra.mxu0 0.0
        %1102 = vmatprep.subr.mxu0 0.0
        %1103 = vmatpush1.msra.mxu0 0.0
        %1104 = vmatprep.subr.mxu0 0.0
        %1105 = vmatpush1.msra.mxu0 0.0
        %1106 = vmatprep.subr.mxu0 0.0
        %1107 = vmatpush1.msra.mxu0 0.0
        %1108 = vmatprep.subr.mxu0 0.0
        %1109 = vmatpush1.msra.mxu0 0.0
        %1110 = vmatprep.subr.mxu0 0.0
        %1111 = vmatpush1.msra.mxu0 0.0
        %1112 = vmatprep.subr.mxu0 0.0
        %1113 = vmatpush1.msra.mxu0 0.0
        %1114 = vmatprep.subr.mxu0 0.0
        %1115 = vmatpush1.msra.mxu0 0.0
        %1116 = vmatprep.subr.mxu0 0.0
        %1117 = vmatpush1.msra.mxu0 0.0
        %1118 = vmatprep.subr.mxu0 0.0
        %1119 = vmatpush1.msra.mxu0 0.0
        %1120 = vmatprep.subr.mxu0 0.0
        %1121 = vmatpush1.msra.mxu0 0.0
        %1122 = vmatprep.subr.mxu0 0.0
        %1123 = vmatpush1.msra.mxu0 0.0
        %1124 = vmatprep.subr.mxu0 0.0
        %1125 = vmatpush1.msra.mxu0 0.0
        %1126 = vmatprep.subr.mxu0 0.0
        %1127 = vmatpush1.msra.mxu0 0.0
        %1128 = vmatprep.subr.mxu0 0.0
        %1129 = vmatpush1.msra.mxu0 0.0
        %1130 = vmatprep.subr.mxu0 0.0
        %1131 = vmatpush1.msra.mxu0 0.0
        %1132 = vmatprep.subr.mxu0 0.0
        %1133 = vmatpush1.msra.mxu0 0.0
        %1134 = vmatprep.subr.mxu0 0.0
        %1135 = vmatpush1.msra.mxu0 0.0
        %1136 = vmatprep.subr.mxu0 0.0
        %1137 = vmatpush1.msra.mxu0 0.0
        %1138 = vmatprep.subr.mxu0 0.0
        %1139 = vmatpush1.msra.mxu0 0.0
        %1140 = vmatprep.subr.mxu0 0.0
        %1141 = vmatpush1.msra.mxu0 0.0
        %1142 = vmatprep.subr.mxu0 0.0
        %1143 = vmatpush1.msra.mxu0 0.0
        %1144 = vmatprep.subr.mxu0 0.0
        %1145 = vmatpush1.msra.mxu0 0.0
        %1146 = vmatprep.subr.mxu0 0.0
        %1147 = vmatpush1.msra.mxu0 0.0
        %1148 = vmatprep.subr.mxu0 0.0
        %1149 = vmatpush1.msra.mxu0 0.0
        %1150 = vmatprep.subr.mxu0 0.0
        %1151 = vmatpush1.msra.mxu0 0.0
        %1152 = vmatprep.subr.mxu0 0.0
        %1153 = vmatpush1.msra.mxu0 0.0
        %1154 = vmatprep.subr.mxu0 0.0
        %1155 = vmatpush1.msra.mxu0 0.0
        %1156 = vmatprep.subr.mxu0 0.0
        %1157 = vmatpush1.msra.mxu0 0.0
        %1158 = vmatprep.subr.mxu0 0.0
        %1159 = vmatpush1.msra.mxu0 0.0
        %1160 = vmatprep.subr.mxu0 0.0
        %1161 = vmatpush1.msra.mxu0 0.0
        %1162 = vmatprep.mubr.f32.mxu0 0.0
        %1163 = vmatmul.mubr.f32.gmra.mrb[0].mxu0 %v1096
        %v1164 = vpop.f32.mrb[0].mxu0
        %v1165 = vadd.f32 0.0, %v1164
        %v1166 = vpop.f32.mrb[0].mxu0
        %1167 = vdwg.mxu0
        %s1168 = scalar_lea.vmem %s2, 8
        %v1169 = vld [vmem:[%s1168] sm:$0x1]
        %v1171 = vlaneseq
        %v1172 = vshrl.u32 %v1171, 7
        %v1173 = vsub.s32 0, %v1172
        %v1174 = vrot.slane %v1169, %v1173
        %v1176 = vmul.f32 %v1165, %v1174
        %v1177 = vadd.f32 %v1092, %v1176
        %v1178 = vld [vmem:[%s3] sm:$0x1]
        %v1180 = vlaneseq
        %v1181 = vshrl.u32 %v1180, 7
        %v1182 = vsub.s32 0, %v1181
        %v1183 = vrot.slane %v1178, %v1182
        %v1185 = vmul.f32 %v1177, %v1183
        %v1186 = vld [vmem:[%s4] sm:$0x1]
        %v1188 = vlaneseq
        %v1189 = vshrl.u32 %v1188, 7
        %v1190 = vsub.s32 0, %v1189
        %v1191 = vrot.slane %v1186, %v1190
        %v1193 = vadd.f32 %v1185, %v1191
        %v1194 = vmax.f32 %v1193, 0.0
        %v1195 = vmin.f32 %v1194, 6.0
        %v1196 = vld [vmem:[%s5] sm:$0xf]
        %v1198 = vsel %vm411, %v1195, 0
        %v1201 = vsel %vm415, %v1196, 0
        %1203 = vmatprep.subr.mxu0 0.0
        %1204 = vmatpush1.msra.mxu0 %v1201
        %1205 = vmatprep.subr.mxu0 0.0
        %1206 = vmatpush1.msra.mxu0 0.0
        %1207 = vmatprep.subr.mxu0 0.0
        %1208 = vmatpush1.msra.mxu0 0.0
        %1209 = vmatprep.subr.mxu0 0.0
        %1210 = vmatpush1.msra.mxu0 0.0
        %1211 = vmatprep.subr.mxu0 0.0
        %1212 = vmatpush1.msra.mxu0 0.0
        %1213 = vmatprep.subr.mxu0 0.0
        %1214 = vmatpush1.msra.mxu0 0.0
        %1215 = vmatprep.subr.mxu0 0.0
        %1216 = vmatpush1.msra.mxu0 0.0
        %1217 = vmatprep.subr.mxu0 0.0
        %1218 = vmatpush1.msra.mxu0 0.0
        %1219 = vmatprep.subr.mxu0 0.0
        %1220 = vmatpush1.msra.mxu0 0.0
        %1221 = vmatprep.subr.mxu0 0.0
        %1222 = vmatpush1.msra.mxu0 0.0
        %1223 = vmatprep.subr.mxu0 0.0
        %1224 = vmatpush1.msra.mxu0 0.0
        %1225 = vmatprep.subr.mxu0 0.0
        %1226 = vmatpush1.msra.mxu0 0.0
        %1227 = vmatprep.subr.mxu0 0.0
        %1228 = vmatpush1.msra.mxu0 0.0
        %1229 = vmatprep.subr.mxu0 0.0
        %1230 = vmatpush1.msra.mxu0 0.0
        %1231 = vmatprep.subr.mxu0 0.0
        %1232 = vmatpush1.msra.mxu0 0.0
        %1233 = vmatprep.subr.mxu0 0.0
        %1234 = vmatpush1.msra.mxu0 0.0
        %1235 = vmatprep.subr.mxu0 0.0
        %1236 = vmatpush1.msra.mxu0 0.0
        %1237 = vmatprep.subr.mxu0 0.0
        %1238 = vmatpush1.msra.mxu0 0.0
        %1239 = vmatprep.subr.mxu0 0.0
        %1240 = vmatpush1.msra.mxu0 0.0
        %1241 = vmatprep.subr.mxu0 0.0
        %1242 = vmatpush1.msra.mxu0 0.0
        %1243 = vmatprep.subr.mxu0 0.0
        %1244 = vmatpush1.msra.mxu0 0.0
        %1245 = vmatprep.subr.mxu0 0.0
        %1246 = vmatpush1.msra.mxu0 0.0
        %1247 = vmatprep.subr.mxu0 0.0
        %1248 = vmatpush1.msra.mxu0 0.0
        %1249 = vmatprep.subr.mxu0 0.0
        %1250 = vmatpush1.msra.mxu0 0.0
        %1251 = vmatprep.subr.mxu0 0.0
        %1252 = vmatpush1.msra.mxu0 0.0
        %1253 = vmatprep.subr.mxu0 0.0
        %1254 = vmatpush1.msra.mxu0 0.0
        %1255 = vmatprep.subr.mxu0 0.0
        %1256 = vmatpush1.msra.mxu0 0.0
        %1257 = vmatprep.subr.mxu0 0.0
        %1258 = vmatpush1.msra.mxu0 0.0
        %1259 = vmatprep.subr.mxu0 0.0
        %1260 = vmatpush1.msra.mxu0 0.0
        %1261 = vmatprep.subr.mxu0 0.0
        %1262 = vmatpush1.msra.mxu0 0.0
        %1263 = vmatprep.subr.mxu0 0.0
        %1264 = vmatpush1.msra.mxu0 0.0
        %1265 = vmatprep.subr.mxu0 0.0
        %1266 = vmatpush1.msra.mxu0 0.0
        %1267 = vmatprep.mubr.f32.mxu0 0.0
        %1268 = vmatmul.mubr.f32.gmra.mrb[0].mxu0 %v1198
        %v1269 = vpop.f32.mrb[0].mxu0
        %v1270 = vadd.f32 0.0, %v1269
        %v1271 = vpop.f32.mrb[0].mxu0
        %1272 = vdwg.mxu0
        %v1273 = vld [vmem:[%s6] sm:$0x1]
        %v1275 = vlaneseq
        %v1276 = vshrl.u32 %v1275, 7
        %v1277 = vsub.s32 0, %v1276
        %v1278 = vrot.slane %v1273, %v1277
        %v1280 = vmul.f32 %v1270, %v1278
        %v1281 = vld [vmem:[%s7] sm:$0x1]
        %v1283 = vlaneseq
        %v1284 = vshrl.u32 %v1283, 7
        %v1285 = vsub.s32 0, %v1284
        %v1286 = vrot.slane %v1281, %v1285
        %v1288 = vadd.f32 %v1280, %v1286
        %v1289 = vmax.f32 %v1288, 0.0
        %v1290 = vmin.f32 %v1289, 6.0
        %v1291 = vadd.f32 %v409, %v1290
        %v1292 = vld [vmem:[%s8] sm:$0xf]
        %v1293 = vld [vmem:[%s9] sm:$0x1]
        %v1295 = vlaneseq
        %v1296 = vshrl.u32 %v1295, 7
        %v1297 = vsub.s32 0, %v1296
        %v1298 = vrot.slane %v1293, %v1297
        %v1301 = vsel %vm411, %v1291, 0
        %v1304 = vsel %vm415, %v1292, 0
        %1306 = vmatprep.subr.mxu0 0.0
        %1307 = vmatpush1.msra.mxu0 %v1304
        %1308 = vmatprep.subr.mxu0 0.0
        %1309 = vmatpush1.msra.mxu0 0.0
        %1310 = vmatprep.subr.mxu0 0.0
        %1311 = vmatpush1.msra.mxu0 0.0
        %1312 = vmatprep.subr.mxu0 0.0
        %1313 = vmatpush1.msra.mxu0 0.0
        %1314 = vmatprep.subr.mxu0 0.0
        %1315 = vmatpush1.msra.mxu0 0.0
        %1316 = vmatprep.subr.mxu0 0.0
        %1317 = vmatpush1.msra.mxu0 0.0
        %1318 = vmatprep.subr.mxu0 0.0
        %1319 = vmatpush1.msra.mxu0 0.0
        %1320 = vmatprep.subr.mxu0 0.0
        %1321 = vmatpush1.msra.mxu0 0.0
        %1322 = vmatprep.subr.mxu0 0.0
        %1323 = vmatpush1.msra.mxu0 0.0
        %1324 = vmatprep.subr.mxu0 0.0
        %1325 = vmatpush1.msra.mxu0 0.0
        %1326 = vmatprep.subr.mxu0 0.0
        %1327 = vmatpush1.msra.mxu0 0.0
        %1328 = vmatprep.subr.mxu0 0.0
        %1329 = vmatpush1.msra.mxu0 0.0
        %1330 = vmatprep.subr.mxu0 0.0
        %1331 = vmatpush1.msra.mxu0 0.0
        %1332 = vmatprep.subr.mxu0 0.0
        %1333 = vmatpush1.msra.mxu0 0.0
        %1334 = vmatprep.subr.mxu0 0.0
        %1335 = vmatpush1.msra.mxu0 0.0
        %1336 = vmatprep.subr.mxu0 0.0
        %1337 = vmatpush1.msra.mxu0 0.0
        %1338 = vmatprep.subr.mxu0 0.0
        %1339 = vmatpush1.msra.mxu0 0.0
        %1340 = vmatprep.subr.mxu0 0.0
        %1341 = vmatpush1.msra.mxu0 0.0
        %1342 = vmatprep.subr.mxu0 0.0
        %1343 = vmatpush1.msra.mxu0 0.0
        %1344 = vmatprep.subr.mxu0 0.0
        %1345 = vmatpush1.msra.mxu0 0.0
        %1346 = vmatprep.subr.mxu0 0.0
        %1347 = vmatpush1.msra.mxu0 0.0
        %1348 = vmatprep.subr.mxu0 0.0
        %1349 = vmatpush1.msra.mxu0 0.0
        %1350 = vmatprep.subr.mxu0 0.0
        %1351 = vmatpush1.msra.mxu0 0.0
        %1352 = vmatprep.subr.mxu0 0.0
        %1353 = vmatpush1.msra.mxu0 0.0
        %1354 = vmatprep.subr.mxu0 0.0
        %1355 = vmatpush1.msra.mxu0 0.0
        %1356 = vmatprep.subr.mxu0 0.0
        %1357 = vmatpush1.msra.mxu0 0.0
        %1358 = vmatprep.subr.mxu0 0.0
        %1359 = vmatpush1.msra.mxu0 0.0
        %1360 = vmatprep.subr.mxu0 0.0
        %1361 = vmatpush1.msra.mxu0 0.0
        %1362 = vmatprep.subr.mxu0 0.0
        %1363 = vmatpush1.msra.mxu0 0.0
        %1364 = vmatprep.subr.mxu0 0.0
        %1365 = vmatpush1.msra.mxu0 0.0
        %1366 = vmatprep.subr.mxu0 0.0
        %1367 = vmatpush1.msra.mxu0 0.0
        %1368 = vmatprep.subr.mxu0 0.0
        %1369 = vmatpush1.msra.mxu0 0.0
        %1370 = vmatprep.mubr.f32.mxu0 0.0
        %1371 = vmatmul.mubr.f32.gmra.mrb[0].mxu0 %v1301
        %v1372 = vpop.f32.mrb[0].mxu0
        %v1373 = vadd.f32 %v1298, %v1372
        %v1374 = vpop.f32.mrb[0].mxu0
        %1375 = vdwg.mxu0
        %vm1376 = vcmask 27648
        %v1377 = vsel %vm1376, %v1373, 0.0
        %v1378 = vrot.slane %v1377, 4
        %v1379 = vadd.f32 %v1377, %v1378
        %v1380 = vrot.slane %v1379, 2
        %v1381 = vadd.f32 %v1379, %v1380
        %v1382 = vrot.slane %v1381, 1
        %v1383 = vadd.f32 %v1381, %v1382
        %v1384 = vrcp.pop 4.0
        %v1385 = vmul.f32 %v1383, %v1384
        %v1386 = vsub.f32 0.0, %v1385
        %v1387 = vmul.f32 %v1386, 1.442695
        %v1388 = vpow.pop %v1387
        %v1389 = vadd.f32 %v1388, 1.0
        %v1390 = vrcp.pop %v1389
        %v1391 = vmul.f32 1.0, %v1390
        %v1392 = vmul.f32 %v1373, %v1391
        %v1393 = vld [vmem:[%s10] sm:$0xf]
        %v1394 = vld [vmem:[%s11] sm:$0x1]
        %v1396 = vlaneseq
        %v1397 = vshrl.u32 %v1396, 7
        %v1398 = vsub.s32 0, %v1397
        %v1399 = vrot.slane %v1394, %v1398
        %v1402 = vsel %vm411, %v1392, 0
        %v1405 = vsel %vm415, %v1393, 0
        %1407 = vmatprep.subr.mxu0 0.0
        %1408 = vmatpush1.msra.mxu0 %v1405
        %1409 = vmatprep.subr.mxu0 0.0
        %1410 = vmatpush1.msra.mxu0 0.0
        %1411 = vmatprep.subr.mxu0 0.0
        %1412 = vmatpush1.msra.mxu0 0.0
        %1413 = vmatprep.subr.mxu0 0.0
        %1414 = vmatpush1.msra.mxu0 0.0
        %1415 = vmatprep.subr.mxu0 0.0
        %1416 = vmatpush1.msra.mxu0 0.0
        %1417 = vmatprep.subr.mxu0 0.0
        %1418 = vmatpush1.msra.mxu0 0.0
        %1419 = vmatprep.subr.mxu0 0.0
        %1420 = vmatpush1.msra.mxu0 0.0
        %1421 = vmatprep.subr.mxu0 0.0
        %1422 = vmatpush1.msra.mxu0 0.0
        %1423 = vmatprep.subr.mxu0 0.0
        %1424 = vmatpush1.msra.mxu0 0.0
        %1425 = vmatprep.subr.mxu0 0.0
        %1426 = vmatpush1.msra.mxu0 0.0
        %1427 = vmatprep.subr.mxu0 0.0
        %1428 = vmatpush1.msra.mxu0 0.0
        %1429 = vmatprep.subr.mxu0 0.0
        %1430 = vmatpush1.msra.mxu0 0.0
        %1431 = vmatprep.subr.mxu0 0.0
        %1432 = vmatpush1.msra.mxu0 0.0
        %1433 = vmatprep.subr.mxu0 0.0
        %1434 = vmatpush1.msra.mxu0 0.0
        %1435 = vmatprep.subr.mxu0 0.0
        %1436 = vmatpush1.msra.mxu0 0.0
        %1437 = vmatprep.subr.mxu0 0.0
        %1438 = vmatpush1.msra.mxu0 0.0
        %1439 = vmatprep.subr.mxu0 0.0
        %1440 = vmatpush1.msra.mxu0 0.0
        %1441 = vmatprep.subr.mxu0 0.0
        %1442 = vmatpush1.msra.mxu0 0.0
        %1443 = vmatprep.subr.mxu0 0.0
        %1444 = vmatpush1.msra.mxu0 0.0
        %1445 = vmatprep.subr.mxu0 0.0
        %1446 = vmatpush1.msra.mxu0 0.0
        %1447 = vmatprep.subr.mxu0 0.0
        %1448 = vmatpush1.msra.mxu0 0.0
        %1449 = vmatprep.subr.mxu0 0.0
        %1450 = vmatpush1.msra.mxu0 0.0
        %1451 = vmatprep.subr.mxu0 0.0
        %1452 = vmatpush1.msra.mxu0 0.0
        %1453 = vmatprep.subr.mxu0 0.0
        %1454 = vmatpush1.msra.mxu0 0.0
        %1455 = vmatprep.subr.mxu0 0.0
        %1456 = vmatpush1.msra.mxu0 0.0
        %1457 = vmatprep.subr.mxu0 0.0
        %1458 = vmatpush1.msra.mxu0 0.0
        %1459 = vmatprep.subr.mxu0 0.0
        %1460 = vmatpush1.msra.mxu0 0.0
        %1461 = vmatprep.subr.mxu0 0.0
        %1462 = vmatpush1.msra.mxu0 0.0
        %1463 = vmatprep.subr.mxu0 0.0
        %1464 = vmatpush1.msra.mxu0 0.0
        %1465 = vmatprep.subr.mxu0 0.0
        %1466 = vmatpush1.msra.mxu0 0.0
        %1467 = vmatprep.subr.mxu0 0.0
        %1468 = vmatpush1.msra.mxu0 0.0
        %1469 = vmatprep.subr.mxu0 0.0
        %1470 = vmatpush1.msra.mxu0 0.0
        %1471 = vmatprep.mubr.f32.mxu0 0.0
        %1472 = vmatmul.mubr.f32.gmra.mrb[0].mxu0 %v1402
        %v1473 = vpop.f32.mrb[0].mxu0
        %v1474 = vadd.f32 %v1399, %v1473
        %v1475 = vpop.f32.mrb[0].mxu0
        %1476 = vdwg.mxu0
        %1477 = vst.msk [vmem:[%s404] sm:$0xf] %vm1376, %v1474
        %s1478 = sand.u32 %s291, 1
        %s1479 = scalar_lea.sflag [#allocation3], %s1478
        %s1480 = sand.u32 %s291, 1
        %s1481 = smul.addr %s1480, 4
        %s1482 = scalar_lea.vmem [#allocation2], %s1481
        // Predicated region
        $region69: #{tpu_custom_call.1} parent=67 // pred_check
          %p1483 = pneg %p301
        $region70: #{tpu_custom_call.1} parent=67 // pred_check_branch
          %1485 = sbr.rel (%p1483) target = $region72
        $region71: #{tpu_custom_call.1} parent=67 // pred_region
          %s1487 = ssub.s32 64, 64
          %1488 = vsyncadd %s1479, %s1487
          %s1489 = smul.addr %s26, 64
          %s1490 = scalar_lea.hbm %s12, %s1489
          %s1492 = sshll.u32 %s1482, 4
          %s1493 = int_to_ptr.vmem [resolvable:$true] %s1492
          %1495 = dma.vmem_to_hbm [thread:$0]  %s1493, 64, %s1490, %s1479
        $region72: #{tpu_custom_call.1} parent=67 // pred_fallthru
          _
      $region68: #{tpu_custom_call.1} parent=5 // pred_fallthru
        _
      %p1496 = scmp.le.s32.totalorder 2, %s21
      // Predicated region
      $region73: #{tpu_custom_call.1} parent=5 // pred_check
        %p1497 = pneg %p1496
      $region74: #{tpu_custom_call.1} parent=5 // pred_check_branch
        %1499 = sbr.rel (%p1497) target = $region76
      $region75: #{tpu_custom_call.1} parent=5 // pred_region
        %s1500 = ssub.s32 %s21, 2
        // Predicated region
        $region77: #{tpu_custom_call.1} parent=75 // pred_check
          %p1501 = pneg %p307
        $region78: #{tpu_custom_call.1} parent=75 // pred_check_branch
          %1503 = sbr.rel (%p1501) target = $region80
        $region79: #{tpu_custom_call.1} parent=75 // pred_region
          %s1504 = sand.u32 %s292, 1
          %s1505 = scalar_lea.sflag [#allocation3], %s1504
          %s1506 = sand.u32 %s292, 1
          %s1507 = smul.addr %s1506, 4
          %s1508 = scalar_lea.vmem [#allocation2], %s1507
          %1509 = dma.done %s1505, 64
        $region80: #{tpu_custom_call.1} parent=75 // pred_fallthru
          _
      $region76: #{tpu_custom_call.1} parent=5 // pred_fallthru
        _
    $region6: #{tpu_custom_call.1} parent=1 // loop_footer
      %s25 = sadd.s32 1, %s21
    $region7: #{tpu_custom_call.1} parent=1 // loop_footer_branch
      %20 = sbr.rel target = $region3
    $region8: #{tpu_custom_call.1} parent=1 // loop_exit
      _
    %1510 = vsyncpa [#allocation3], 1
    %s1511 = scalar_lea.sflag [#allocation3], 1
    %1512 = vsyncpa %s1511, 1

</llo_original>
